<compile_context>
chip_gen: v7x
topology: tpu7x:2x2x1
jax: 0.10.0
libtpu: 0.0.40
codegen_flags: <defaults>
</compile_context>

<pallas_src>
import functools

import jax
import jax.numpy as jnp
import numpy as np
from jax import lax
from jax.experimental import pallas as pl
from jax.experimental.pallas import tpu as pltpu


def fixed_padding(kernel_size, dilation):
    kernel_size_effective = kernel_size + (kernel_size - 1) * (dilation - 1)
    pad_total = kernel_size_effective - 1
    pad_beg = pad_total // 2
    pad_end = pad_total - pad_beg
    return (pad_beg, pad_end, pad_beg, pad_end)


def _round_up(x, m):
    return ((x + m - 1) // m) * m


# -----------------------------------------------------------------------------
# Fused Pallas kernel: expand 1x1 -> depthwise 3x3 -> project 1x1 (+ residual)
# -----------------------------------------------------------------------------
def _fused_inverted_residual_kernel(*refs, stride, dilation, th, th_in, wo_pad,
                                    hidden, has_expand, use_res, mm_dtype):
    # --- unpack refs (inputs..., outputs...) ----------------------------------
    it = iter(refs)
    x_ref = next(it)                       # (1, hp_k, wp_k, cin_k)  padded input
    if has_expand:
        w_exp_ref = next(it)               # (cin_k, hidden)   BN scale pre-folded
        b_exp_ref = next(it)               # (1, hidden) f32
    w_dw_ref = next(it)                    # (3, 3, hidden) f32, BN scale pre-folded
    b_dw_ref = next(it)                    # (1, hidden) f32
    w_proj_ref = next(it)                  # (hidden, cout)    BN scale pre-folded
    b_proj_ref = next(it)                  # (1, cout) f32
    o_ref = next(it)                       # (1, th, wo_pad, cout)

    wp_k = x_ref.shape[2]
    cout = o_ref.shape[3]

    t = pl.program_id(1)
    row0 = pl.multiple_of(t * (th * stride), th * stride)

    # Haloed padded-input row window for this output-row tile (stays on-chip).
    xwin = x_ref[0, pl.ds(row0, th_in), :, :]          # (th_in, wp_k, cin_k)

    # --- stage 1: expansion 1x1 conv (+ folded BN) + ReLU6 — ONE fused matmul --
    if has_expand:
        x2d = xwin.reshape(th_in * wp_k, xwin.shape[-1]).astype(mm_dtype)
        acc = jnp.dot(x2d, w_exp_ref[...], preferred_element_type=jnp.float32)
        hid = jnp.clip(acc + b_exp_ref[...], 0.0, 6.0)
        hid = hid.reshape(th_in, wp_k, hidden).astype(mm_dtype)
    else:
        hid = xwin                                     # hidden == cin_k

    # --- stage 2: depthwise 3x3 conv (+ folded BN) + ReLU6 ---------------------
    # Stride-1 accumulation over the 9 taps, one strided subsample at the end.
    w_dw = w_dw_ref[...]                               # hoisted out of the loop
    h_full = (th - 1) * stride + 1
    w_full = (wo_pad - 1) * stride + 1
    acc = jnp.zeros((h_full, w_full, hidden), jnp.float32)
    for kh in range(3):
        for kw in range(3):
            xs = lax.slice(
                hid,
                (kh * dilation, kw * dilation, 0),
                (kh * dilation + h_full, kw * dilation + w_full, hidden))
            acc = acc + xs.astype(jnp.float32) * w_dw[kh, kw]
    if stride > 1:
        acc = acc[::stride, ::stride, :]               # (th, wo_pad, hidden)
    dw = jnp.clip(acc + b_dw_ref[...], 0.0, 6.0)

    # --- stage 3: projection 1x1 conv + BN bias (+ fused residual) -------------
    dw2d = dw.reshape(th * wo_pad, hidden).astype(mm_dtype)
    out = jnp.dot(dw2d, w_proj_ref[...], preferred_element_type=jnp.float32)
    out = out + b_proj_ref[...]
    out3 = out.reshape(th, wo_pad, cout)
    if use_res:
        # residual = un-padded x rows/cols, taken from the halo window
        res = xwin[dilation:dilation + th, dilation:dilation + wo_pad, :]
        out3 = out3 + res.astype(jnp.float32)
    o_ref[0] = out3.astype(o_ref.dtype)                # single dense tile store


# -----------------------------------------------------------------------------
# Wrapper
# -----------------------------------------------------------------------------
def inverted_residual_pallas(x_nchw, params, *, oup, stride, dilation,
                             expand_ratio, row_tile=16, lane_multiple=128,
                             matmul_dtype=jnp.bfloat16,
                             vmem_limit_bytes=64 * 1024 * 1024):
    n, inp, h, w = x_nchw.shape
    hidden = params["hidden"]
    has_expand = expand_ratio != 1
    use_res = (stride == 1) and (inp == oup)

    # Lane padding: channels map to the 128-wide lane dim.
    hidden_p = _round_up(hidden, lane_multiple)
    cout_p = _round_up(oup, lane_multiple)
    if not has_expand:
        cin_p = hidden_p              # hidden tensor IS the input tensor
    elif use_res:
        cin_p = cout_p                # residual add needs matching lanes
    else:
        cin_p = inp                   # pure matmul K dim; leave unpadded

    # NHWC + semantic fixed padding (+ zero channel padding).
    x = jnp.transpose(x_nchw, (0, 2, 3, 1))
    pb, pe, _, _ = fixed_padding(3, dilation)
    x_pad = jnp.pad(x, ((0, 0), (pb, pe), (pb, pe), (0, cin_p - inp)))
    _, hp, wp, _ = x_pad.shape
    ho = (hp - 2 * dilation - 1) // stride + 1
    wo = (wp - 2 * dilation - 1) // stride + 1

    # Output-row tiling (2*dilation halo) and sublane-aligned W padding.
    th = min(row_tile, ho)
    n_tiles = pl.cdiv(ho, th)
    ho_pad = n_tiles * th
    th_in = (th - 1) * stride + 2 * dilation + 1
    wo_pad = _round_up(wo, 8)
    hp_need = (ho_pad - 1) * stride + 2 * dilation + 1
    wp_need = max(wp, (wo_pad - 1) * stride + 2 * dilation + 1)
    wp_k = _round_up(wp_need, 8)
    hp_k = max(hp, hp_need)
    x_pad = jnp.pad(x_pad, ((0, 0), (0, hp_k - hp), (0, wp_k - wp), (0, 0)))

    # Fold BN scale into weights, zero-pad channels, pre-cast matmul weights.
    f32 = jnp.float32

    def pad2(a, r, c):
        return jnp.pad(a, ((0, r - a.shape[0]), (0, c - a.shape[1])))

    args = [x_pad]
    in_specs = [pl.BlockSpec((1, hp_k, wp_k, cin_p), lambda b, t: (b, 0, 0, 0))]
    if has_expand:
        w_exp = params["w_exp"].astype(f32) * params["scale_exp"][None, :].astype(f32)
        w_exp = pad2(w_exp, cin_p, hidden_p).astype(matmul_dtype)
        b_exp = jnp.pad(params["bias_exp"].astype(f32),
                        (0, hidden_p - hidden)).reshape(1, hidden_p)
        args += [w_exp, b_exp]
        in_specs += [pl.BlockSpec((cin_p, hidden_p), lambda b, t: (0, 0)),
                     pl.BlockSpec((1, hidden_p), lambda b, t: (0, 0))]
    w_dw = params["w_dw"].astype(f32) * params["scale_dw"][None, None, :].astype(f32)
    w_dw = jnp.pad(w_dw, ((0, 0), (0, 0), (0, hidden_p - hidden)))
    b_dw = jnp.pad(params["bias_dw"].astype(f32),
                   (0, hidden_p - hidden)).reshape(1, hidden_p)
    w_proj = params["w_proj"].astype(f32) * params["scale_proj"][None, :].astype(f32)
    w_proj = pad2(w_proj, hidden_p, cout_p).astype(matmul_dtype)
    b_proj = jnp.pad(params["bias_proj"].astype(f32),
                     (0, cout_p - oup)).reshape(1, cout_p)
    args += [w_dw, b_dw, w_proj, b_proj]
    in_specs += [pl.BlockSpec((3, 3, hidden_p), lambda b, t: (0, 0, 0)),
                 pl.BlockSpec((1, hidden_p), lambda b, t: (0, 0)),
                 pl.BlockSpec((hidden_p, cout_p), lambda b, t: (0, 0)),
                 pl.BlockSpec((1, cout_p), lambda b, t: (0, 0))]

    kernel = functools.partial(
        _fused_inverted_residual_kernel,
        stride=stride, dilation=dilation, th=th, th_in=th_in, wo_pad=wo_pad,
        hidden=hidden_p, has_expand=has_expand, use_res=use_res,
        mm_dtype=matmul_dtype)

    out = pl.pallas_call(
        kernel,
        out_shape=jax.ShapeDtypeStruct((n, ho_pad, wo_pad, cout_p), x.dtype),
        grid=(n, n_tiles),
        in_specs=in_specs,
        out_specs=pl.BlockSpec((1, th, wo_pad, cout_p), lambda b, t: (b, t, 0, 0)),
        compiler_params=pltpu.CompilerParams(
            dimension_semantics=("parallel", "parallel"),
            vmem_limit_bytes=vmem_limit_bytes),
    )(*args)

    out = out[:, :ho, :wo, :oup]                       # drop padded rows/cols/lanes
    return jnp.transpose(out, (0, 3, 1, 2))            # back to NCHW


# -----------------------------------------------------------------------------
# Parameter construction + pure-JAX reference
# -----------------------------------------------------------------------------
def make_params(key, inp, oup, expand_ratio, dtype=jnp.float32):
    """Deterministic synthetic params; BN folded to (scale, bias) with eps=1e-5."""
    hidden = int(round(inp * expand_ratio))
    ks = jax.random.split(key, 16)
    eps = 1e-5
    p = {"hidden": hidden}

    def bn_fold(k0, k1, k2, k3, c):
        gamma = jax.random.uniform(k0, (c,), dtype, 0.5, 1.5)
        beta = jax.random.normal(k1, (c,), dtype) * 0.1
        mean = jax.random.normal(k2, (c,), dtype) * 0.1
        var = jax.random.uniform(k3, (c,), dtype, 0.5, 1.5)
        scale = gamma / jnp.sqrt(var + eps)
        return scale, beta - mean * scale

    if expand_ratio != 1:
        w_exp = jax.random.normal(ks[0], (hidden, inp), dtype) * 0.2  # torch (out,in,1,1)
        p["w_exp"] = jnp.transpose(w_exp)                              # (inp, hidden)
        p["scale_exp"], p["bias_exp"] = bn_fold(ks[1], ks[2], ks[3], ks[4], hidden)

    w_dw = jax.random.normal(ks[5], (hidden, 1, 3, 3), dtype) * 0.2    # torch depthwise
    p["w_dw"] = jnp.transpose(w_dw[:, 0], (1, 2, 0))                   # (3, 3, hidden)
    p["scale_dw"], p["bias_dw"] = bn_fold(ks[6], ks[7], ks[8], ks[9], hidden)

    w_proj = jax.random.normal(ks[10], (oup, hidden), dtype) * 0.2     # torch (out,in,1,1)
    p["w_proj"] = jnp.transpose(w_proj)                                # (hidden, oup)
    p["scale_proj"], p["bias_proj"] = bn_fold(ks[11], ks[12], ks[13], ks[14], oup)
    return p


def inverted_residual_ref(x_nchw, params, *, oup, stride, dilation, expand_ratio):
    """Pure-JAX reference for correctness checking."""
    n, inp, h, w = x_nchw.shape
    hidden = params["hidden"]
    use_res_connect = (stride == 1) and (inp == oup)
    x = jnp.transpose(x_nchw, (0, 2, 3, 1))
    pb, pe, _, _ = fixed_padding(3, dilation)
    hid = jnp.pad(x, ((0, 0), (pb, pe), (pb, pe), (0, 0)))
    if expand_ratio != 1:
        hid = jnp.einsum("nhwc,co->nhwo", hid, params["w_exp"])
        hid = jnp.clip(hid * params["scale_exp"] + params["bias_exp"], 0.0, 6.0)
    hid = lax.conv_general_dilated(
        hid, params["w_dw"].reshape(3, 3, 1, hidden),
        window_strides=(stride, stride), padding="VALID",
        rhs_dilation=(dilation, dilation),
        dimension_numbers=("NHWC", "HWIO", "NHWC"),
        feature_group_count=hidden)
    hid = jnp.clip(hid * params["scale_dw"] + params["bias_dw"], 0.0, 6.0)
    out = jnp.einsum("nhwc,co->nhwo", hid, params["w_proj"])
    out = out * params["scale_proj"] + params["bias_proj"]
    if use_res_connect:
        out = out + x
    return jnp.transpose(out, (0, 3, 1, 2))


if __name__ == "__main__":
    key = jax.random.PRNGKey(0)
    configs = [
        # (N, inp, oup, H, W, stride, dilation, expand_ratio, row_tile)
        dict(N=2, INP=8, OUP=8, H=16, W=16, STRIDE=1, DILATION=1, EXPAND=4, ROW_TILE=6),   # residual, tail tile
        dict(N=2, INP=8, OUP=16, H=16, W=16, STRIDE=2, DILATION=1, EXPAND=4, ROW_TILE=4),  # stride 2, 2 tiles
        dict(N=1, INP=16, OUP=16, H=16, W=16, STRIDE=1, DILATION=2, EXPAND=1, ROW_TILE=16),# no expand, dilated
    ]
    for cfg in configs:
        key, kx, kp = jax.random.split(key, 3)
        x = jax.random.normal(kx, (cfg["N"], cfg["INP"], cfg["H"], cfg["W"]), jnp.float32)
        params = make_params(kp, cfg["INP"], cfg["OUP"], cfg["EXPAND"])

        ref = inverted_residual_ref(
            x, params, oup=cfg["OUP"], stride=cfg["STRIDE"],
            dilation=cfg["DILATION"], expand_ratio=cfg["EXPAND"])
        ref = jax.block_until_ready(ref)

        # f32 mode validates tightly; bf16 (default perf mode) with looser tol.
        for mm_dtype, tol in ((jnp.float32, 2e-3), (jnp.bfloat16, 5e-2)):
            out = inverted_residual_pallas(
                x, params, oup=cfg["OUP"], stride=cfg["STRIDE"],
                dilation=cfg["DILATION"], expand_ratio=cfg["EXPAND"],
                row_tile=cfg["ROW_TILE"], matmul_dtype=mm_dtype)
            out = jax.block_until_ready(out)
            assert out.shape == ref.shape, (out.shape, ref.shape)
            np.testing.assert_allclose(np.asarray(out), np.asarray(ref),
                                       rtol=tol, atol=tol)
    print("KERNEL_OK")
</pallas_src>

<mosaic_0001>
module attributes {stable_mosaic.version = 11 : i64} {
  func.func @_fused_inverted_residual_kernel(%arg0: i32, %arg1: i32, %arg2: memref<1x20x24x128xf32, #tpu.memory_space<vmem>>, %arg3: memref<128x128xf32, #tpu.memory_space<vmem>>, %arg4: memref<1x128xf32, #tpu.memory_space<vmem>>, %arg5: memref<3x3x128xf32, #tpu.memory_space<vmem>>, %arg6: memref<1x128xf32, #tpu.memory_space<vmem>>, %arg7: memref<128x128xf32, #tpu.memory_space<vmem>>, %arg8: memref<1x128xf32, #tpu.memory_space<vmem>>, %arg9: memref<1x6x16x128xf32, #tpu.memory_space<vmem>>) attributes {dimension_semantics = [#tpu.dimension_semantics<parallel>, #tpu.dimension_semantics<parallel>], iteration_bounds = array<i64: 2, 3>, scalar_prefetch = 0 : i64, scratch_operands = 0 : i64, tpu.core_type = #tpu.core_type<tc>, window_params = [{transform_indices = @transform_0, window_bounds = array<i64: 1, 20, 24, 128>}, {pipeline_mode = #tpu.pipeline_mode<synchronous>, transform_indices = @transform_1, window_bounds = array<i64: 128, 128>}, {pipeline_mode = #tpu.pipeline_mode<synchronous>, transform_indices = @transform_2, window_bounds = array<i64: 1, 128>}, {pipeline_mode = #tpu.pipeline_mode<synchronous>, transform_indices = @transform_3, window_bounds = array<i64: 3, 3, 128>}, {pipeline_mode = #tpu.pipeline_mode<synchronous>, transform_indices = @transform_4, window_bounds = array<i64: 1, 128>}, {pipeline_mode = #tpu.pipeline_mode<synchronous>, transform_indices = @transform_5, window_bounds = array<i64: 128, 128>}, {pipeline_mode = #tpu.pipeline_mode<synchronous>, transform_indices = @transform_6, window_bounds = array<i64: 1, 128>}, {transform_indices = @transform_7, window_bounds = array<i64: 1, 6, 16, 128>}]} {
    %c6_i32 = arith.constant 6 : i32
    %0 = arith.muli %arg1, %c6_i32 : i32
    %1 = tpu.assume_multiple %0, 6 : i32
    %c0 = arith.constant 0 : index
    %2 = arith.index_cast %1 : i32 to index
    %c0_0 = arith.constant 0 : index
    %c0_1 = arith.constant 0 : index
    %3 = vector.load %arg2[%c0, %2, %c0_0, %c0_1] : memref<1x20x24x128xf32, #tpu.memory_space<vmem>>, vector<1x8x24x128xf32>
    %4 = vector.shape_cast %3 : vector<1x8x24x128xf32> to vector<8x24x128xf32>
    %5 = vector.shape_cast %4 : vector<8x24x128xf32> to vector<192x128xf32>
    %c0_2 = arith.constant 0 : index
    %c0_3 = arith.constant 0 : index
    %6 = vector.load %arg3[%c0_2, %c0_3] : memref<128x128xf32, #tpu.memory_space<vmem>>, vector<128x128xf32>
    %cst = arith.constant dense<0.000000e+00> : vector<192x128xf32>
    %7 = tpu.matmul %5, %6, %cst {dimension_numbers = #tpu.dot_dimension_numbers<[1], [0], [0], [1], [0, 0, 1, 1], [], []>} : vector<192x128xf32>, vector<128x128xf32>, vector<192x128xf32> -> vector<192x128xf32>
    %c0_4 = arith.constant 0 : index
    %c0_5 = arith.constant 0 : index
    %8 = vector.load %arg4[%c0_4, %c0_5] : memref<1x128xf32, #tpu.memory_space<vmem>>, vector<1x128xf32>
    %9 = vector.broadcast %8 : vector<1x128xf32> to vector<192x128xf32>
    %10 = arith.addf %7, %9 : vector<192x128xf32>
    %cst_6 = arith.constant 0.000000e+00 : f32
    %cst_7 = arith.constant 6.000000e+00 : f32
    %11 = vector.broadcast %cst_6 : f32 to vector<192x128xf32>
    %12 = arith.maximumf %11, %10 : vector<192x128xf32>
    %13 = vector.broadcast %cst_7 : f32 to vector<192x128xf32>
    %14 = arith.minimumf %13, %12 : vector<192x128xf32>
    %15 = vector.shape_cast %14 : vector<192x128xf32> to vector<8x24x128xf32>
    %c0_8 = arith.constant 0 : index
    %c0_9 = arith.constant 0 : index
    %c0_10 = arith.constant 0 : index
    %16 = vector.load %arg5[%c0_8, %c0_9, %c0_10] : memref<3x3x128xf32, #tpu.memory_space<vmem>>, vector<3x3x128xf32>
    %cst_11 = arith.constant 0.000000e+00 : f32
    %17 = vector.broadcast %cst_11 : f32 to vector<6x16x128xf32>
    %18 = vector.extract_strided_slice %15 {offsets = [0, 0, 0], sizes = [6, 16, 128], strides = [1, 1, 1]} : vector<8x24x128xf32> to vector<6x16x128xf32>
    %19 = vector.extract_strided_slice %16 {offsets = [0, 0, 0], sizes = [1, 1, 128], strides = [1, 1, 1]} : vector<3x3x128xf32> to vector<1x1x128xf32>
    %20 = vector.shape_cast %19 : vector<1x1x128xf32> to vector<128xf32>
    %21 = vector.shape_cast %20 : vector<128xf32> to vector<1x1x128xf32>
    %22 = vector.broadcast %21 : vector<1x1x128xf32> to vector<6x16x128xf32>
    %23 = arith.mulf %18, %22 : vector<6x16x128xf32>
    %24 = arith.addf %17, %23 : vector<6x16x128xf32>
    %25 = vector.extract_strided_slice %15 {offsets = [0, 1, 0], sizes = [6, 16, 128], strides = [1, 1, 1]} : vector<8x24x128xf32> to vector<6x16x128xf32>
    %26 = vector.extract_strided_slice %16 {offsets = [0, 1, 0], sizes = [1, 1, 128], strides = [1, 1, 1]} : vector<3x3x128xf32> to vector<1x1x128xf32>
    %27 = vector.shape_cast %26 : vector<1x1x128xf32> to vector<128xf32>
    %28 = vector.shape_cast %27 : vector<128xf32> to vector<1x1x128xf32>
    %29 = vector.broadcast %28 : vector<1x1x128xf32> to vector<6x16x128xf32>
    %30 = arith.mulf %25, %29 : vector<6x16x128xf32>
    %31 = arith.addf %24, %30 : vector<6x16x128xf32>
    %32 = vector.extract_strided_slice %15 {offsets = [0, 2, 0], sizes = [6, 16, 128], strides = [1, 1, 1]} : vector<8x24x128xf32> to vector<6x16x128xf32>
    %33 = vector.extract_strided_slice %16 {offsets = [0, 2, 0], sizes = [1, 1, 128], strides = [1, 1, 1]} : vector<3x3x128xf32> to vector<1x1x128xf32>
    %34 = vector.shape_cast %33 : vector<1x1x128xf32> to vector<128xf32>
    %35 = vector.shape_cast %34 : vector<128xf32> to vector<1x1x128xf32>
    %36 = vector.broadcast %35 : vector<1x1x128xf32> to vector<6x16x128xf32>
    %37 = arith.mulf %32, %36 : vector<6x16x128xf32>
    %38 = arith.addf %31, %37 : vector<6x16x128xf32>
    %39 = vector.extract_strided_slice %15 {offsets = [1, 0, 0], sizes = [6, 16, 128], strides = [1, 1, 1]} : vector<8x24x128xf32> to vector<6x16x128xf32>
    %40 = vector.extract_strided_slice %16 {offsets = [1, 0, 0], sizes = [1, 1, 128], strides = [1, 1, 1]} : vector<3x3x128xf32> to vector<1x1x128xf32>
    %41 = vector.shape_cast %40 : vector<1x1x128xf32> to vector<128xf32>
    %42 = vector.shape_cast %41 : vector<128xf32> to vector<1x1x128xf32>
    %43 = vector.broadcast %42 : vector<1x1x128xf32> to vector<6x16x128xf32>
    %44 = arith.mulf %39, %43 : vector<6x16x128xf32>
    %45 = arith.addf %38, %44 : vector<6x16x128xf32>
    %46 = vector.extract_strided_slice %15 {offsets = [1, 1, 0], sizes = [6, 16, 128], strides = [1, 1, 1]} : vector<8x24x128xf32> to vector<6x16x128xf32>
    %47 = vector.extract_strided_slice %16 {offsets = [1, 1, 0], sizes = [1, 1, 128], strides = [1, 1, 1]} : vector<3x3x128xf32> to vector<1x1x128xf32>
    %48 = vector.shape_cast %47 : vector<1x1x128xf32> to vector<128xf32>
    %49 = vector.shape_cast %48 : vector<128xf32> to vector<1x1x128xf32>
    %50 = vector.broadcast %49 : vector<1x1x128xf32> to vector<6x16x128xf32>
    %51 = arith.mulf %46, %50 : vector<6x16x128xf32>
    %52 = arith.addf %45, %51 : vector<6x16x128xf32>
    %53 = vector.extract_strided_slice %15 {offsets = [1, 2, 0], sizes = [6, 16, 128], strides = [1, 1, 1]} : vector<8x24x128xf32> to vector<6x16x128xf32>
    %54 = vector.extract_strided_slice %16 {offsets = [1, 2, 0], sizes = [1, 1, 128], strides = [1, 1, 1]} : vector<3x3x128xf32> to vector<1x1x128xf32>
    %55 = vector.shape_cast %54 : vector<1x1x128xf32> to vector<128xf32>
    %56 = vector.shape_cast %55 : vector<128xf32> to vector<1x1x128xf32>
    %57 = vector.broadcast %56 : vector<1x1x128xf32> to vector<6x16x128xf32>
    %58 = arith.mulf %53, %57 : vector<6x16x128xf32>
    %59 = arith.addf %52, %58 : vector<6x16x128xf32>
    %60 = vector.extract_strided_slice %15 {offsets = [2, 0, 0], sizes = [6, 16, 128], strides = [1, 1, 1]} : vector<8x24x128xf32> to vector<6x16x128xf32>
    %61 = vector.extract_strided_slice %16 {offsets = [2, 0, 0], sizes = [1, 1, 128], strides = [1, 1, 1]} : vector<3x3x128xf32> to vector<1x1x128xf32>
    %62 = vector.shape_cast %61 : vector<1x1x128xf32> to vector<128xf32>
    %63 = vector.shape_cast %62 : vector<128xf32> to vector<1x1x128xf32>
    %64 = vector.broadcast %63 : vector<1x1x128xf32> to vector<6x16x128xf32>
    %65 = arith.mulf %60, %64 : vector<6x16x128xf32>
    %66 = arith.addf %59, %65 : vector<6x16x128xf32>
    %67 = vector.extract_strided_slice %15 {offsets = [2, 1, 0], sizes = [6, 16, 128], strides = [1, 1, 1]} : vector<8x24x128xf32> to vector<6x16x128xf32>
    %68 = vector.extract_strided_slice %16 {offsets = [2, 1, 0], sizes = [1, 1, 128], strides = [1, 1, 1]} : vector<3x3x128xf32> to vector<1x1x128xf32>
    %69 = vector.shape_cast %68 : vector<1x1x128xf32> to vector<128xf32>
    %70 = vector.shape_cast %69 : vector<128xf32> to vector<1x1x128xf32>
    %71 = vector.broadcast %70 : vector<1x1x128xf32> to vector<6x16x128xf32>
    %72 = arith.mulf %67, %71 : vector<6x16x128xf32>
    %73 = arith.addf %66, %72 : vector<6x16x128xf32>
    %74 = vector.extract_strided_slice %15 {offsets = [2, 2, 0], sizes = [6, 16, 128], strides = [1, 1, 1]} : vector<8x24x128xf32> to vector<6x16x128xf32>
    %75 = vector.extract_strided_slice %16 {offsets = [2, 2, 0], sizes = [1, 1, 128], strides = [1, 1, 1]} : vector<3x3x128xf32> to vector<1x1x128xf32>
    %76 = vector.shape_cast %75 : vector<1x1x128xf32> to vector<128xf32>
    %77 = vector.shape_cast %76 : vector<128xf32> to vector<1x1x128xf32>
    %78 = vector.broadcast %77 : vector<1x1x128xf32> to vector<6x16x128xf32>
    %79 = arith.mulf %74, %78 : vector<6x16x128xf32>
    %80 = arith.addf %73, %79 : vector<6x16x128xf32>
    %c0_12 = arith.constant 0 : index
    %c0_13 = arith.constant 0 : index
    %81 = vector.load %arg6[%c0_12, %c0_13] : memref<1x128xf32, #tpu.memory_space<vmem>>, vector<1x128xf32>
    %82 = vector.shape_cast %81 : vector<1x128xf32> to vector<1x1x128xf32>
    %83 = vector.broadcast %82 : vector<1x1x128xf32> to vector<6x16x128xf32>
    %84 = arith.addf %80, %83 : vector<6x16x128xf32>
    %cst_14 = arith.constant 0.000000e+00 : f32
    %cst_15 = arith.constant 6.000000e+00 : f32
    %85 = vector.broadcast %cst_14 : f32 to vector<6x16x128xf32>
    %86 = arith.maximumf %85, %84 : vector<6x16x128xf32>
    %87 = vector.broadcast %cst_15 : f32 to vector<6x16x128xf32>
    %88 = arith.minimumf %87, %86 : vector<6x16x128xf32>
    %89 = vector.shape_cast %88 : vector<6x16x128xf32> to vector<96x128xf32>
    %c0_16 = arith.constant 0 : index
    %c0_17 = arith.constant 0 : index
    %90 = vector.load %arg7[%c0_16, %c0_17] : memref<128x128xf32, #tpu.memory_space<vmem>>, vector<128x128xf32>
    %cst_18 = arith.constant dense<0.000000e+00> : vector<96x128xf32>
    %91 = tpu.matmul %89, %90, %cst_18 {dimension_numbers = #tpu.dot_dimension_numbers<[1], [0], [0], [1], [0, 0, 1, 1], [], []>} : vector<96x128xf32>, vector<128x128xf32>, vector<96x128xf32> -> vector<96x128xf32>
    %c0_19 = arith.constant 0 : index
    %c0_20 = arith.constant 0 : index
    %92 = vector.load %arg8[%c0_19, %c0_20] : memref<1x128xf32, #tpu.memory_space<vmem>>, vector<1x128xf32>
    %93 = vector.broadcast %92 : vector<1x128xf32> to vector<96x128xf32>
    %94 = arith.addf %91, %93 : vector<96x128xf32>
    %95 = vector.shape_cast %94 : vector<96x128xf32> to vector<6x16x128xf32>
    %96 = vector.extract_strided_slice %4 {offsets = [1, 1, 0], sizes = [6, 16, 128], strides = [1, 1, 1]} : vector<8x24x128xf32> to vector<6x16x128xf32>
    %97 = arith.addf %95, %96 : vector<6x16x128xf32>
    %c0_21 = arith.constant 0 : index
    %c0_22 = arith.constant 0 : index
    %c0_23 = arith.constant 0 : index
    %c0_24 = arith.constant 0 : index
    %98 = vector.load %arg9[%c0_21, %c0_22, %c0_23, %c0_24] : memref<1x6x16x128xf32, #tpu.memory_space<vmem>>, vector<1x6x16x128xf32>
    %99 = vector.shape_cast %98 : vector<1x6x16x128xf32> to vector<6x16x128xf32>
    %100 = vector.shape_cast %97 : vector<6x16x128xf32> to vector<1x6x16x128xf32>
    tpu.vector_store %arg9[%c0_21, %c0_22, %c0_23, %c0_24], %100 {strides = array<i32>} : memref<1x6x16x128xf32, #tpu.memory_space<vmem>>, vector<1x6x16x128xf32>,
    return
  }
  func.func @transform_0(%arg0: i32, %arg1: i32) -> (i32, i32, i32, i32) {
    %c0_i32 = arith.constant 0 : i32
    %c0_i32_0 = arith.constant 0 : i32
    %c0_i32_1 = arith.constant 0 : i32
    %c0_i32_2 = arith.constant 0 : i32
    return %arg0, %c0_i32, %c0_i32_0, %c0_i32_1 : i32, i32, i32, i32
  }
  func.func @transform_1(%arg0: i32, %arg1: i32) -> (i32, i32) {
    %c0_i32 = arith.constant 0 : i32
    %c0_i32_0 = arith.constant 0 : i32
    %c0_i32_1 = arith.constant 0 : i32
    return %c0_i32, %c0_i32_0 : i32, i32
  }
  func.func @transform_2(%arg0: i32, %arg1: i32) -> (i32, i32) {
    %c0_i32 = arith.constant 0 : i32
    %c0_i32_0 = arith.constant 0 : i32
    %c0_i32_1 = arith.constant 0 : i32
    return %c0_i32, %c0_i32_0 : i32, i32
  }
  func.func @transform_3(%arg0: i32, %arg1: i32) -> (i32, i32, i32) {
    %c0_i32 = arith.constant 0 : i32
    %c0_i32_0 = arith.constant 0 : i32
    %c0_i32_1 = arith.constant 0 : i32
    %c0_i32_2 = arith.constant 0 : i32
    return %c0_i32, %c0_i32_0, %c0_i32_1 : i32, i32, i32
  }
  func.func @transform_4(%arg0: i32, %arg1: i32) -> (i32, i32) {
    %c0_i32 = arith.constant 0 : i32
    %c0_i32_0 = arith.constant 0 : i32
    %c0_i32_1 = arith.constant 0 : i32
    return %c0_i32, %c0_i32_0 : i32, i32
  }
  func.func @transform_5(%arg0: i32, %arg1: i32) -> (i32, i32) {
    %c0_i32 = arith.constant 0 : i32
    %c0_i32_0 = arith.constant 0 : i32
    %c0_i32_1 = arith.constant 0 : i32
    return %c0_i32, %c0_i32_0 : i32, i32
  }
  func.func @transform_6(%arg0: i32, %arg1: i32) -> (i32, i32) {
    %c0_i32 = arith.constant 0 : i32
    %c0_i32_0 = arith.constant 0 : i32
    %c0_i32_1 = arith.constant 0 : i32
    return %c0_i32, %c0_i32_0 : i32, i32
  }
  func.func @transform_7(%arg0: i32, %arg1: i32) -> (i32, i32, i32, i32) {
    %c0_i32 = arith.constant 0 : i32
    %c0_i32_0 = arith.constant 0 : i32
    %c0_i32_1 = arith.constant 0 : i32
    return %arg0, %arg1, %c0_i32, %c0_i32_0 : i32, i32, i32, i32
  }
}

</mosaic_0001>

<llo_original>
// kernel: tpu_custom_call.1
$region0: #{tpu_custom_call.1}
  #allocation0 [shape = 'u32[]', space=smem, size = 0x4, offset = 0x4, fixed_abs, tag = 'smem constant byte address 0x4 - core index']
  #allocation1 [shape = 'u32[144,128]{1,0:T(1,128)}', space=vmem, size = 0x12000, scoped, tag = 'internal scratch']
  %s0 = inlined_call_operand.hbm [shape: f32[2,20,24,128], index: 0, kind: input, shape index: {}]
  %s1 = inlined_call_operand.hbm [shape: f32[128,128], index: 1, kind: input, shape index: {}]
  %s2 = inlined_call_operand.hbm [shape: f32[1,128], index: 2, kind: input, shape index: {}]
  %s3 = inlined_call_operand.hbm [shape: f32[3,3,128], index: 3, kind: input, shape index: {}]
  %s4 = inlined_call_operand.hbm [shape: f32[1,128], index: 4, kind: input, shape index: {}]
  %s5 = inlined_call_operand.hbm [shape: f32[128,128], index: 5, kind: input, shape index: {}]
  %s6 = inlined_call_operand.hbm [shape: f32[1,128], index: 6, kind: input, shape index: {}]
  %s7 = inlined_call_operand.hbm [shape: f32[2,18,16,128], index: 7, kind: output, shape index: {}]
  %s8 = sld [smem:[#allocation0]]
  $region89: #{tpu_custom_call.1} parent=0
    _
  %s10 = ssub.s32 1, %s8
  %s11 = scalar_select 0, %s10, %s8
  $region1: #{tpu_custom_call.1} parent=0
    #allocation2 [shape = 'u8[491520]{0}', space=vmem, size = 0x78000, scoped, tag = 'input window, operand 0']
    #allocation3 [shape = 's32[2]{0}', space=sflag, size = 0x8, scoped, tag = 'scoped memory for tpu_custom_call.1']
    #allocation4 [shape = 's32[2]{0}', space=sflag, size = 0x8, scoped, tag = 'scoped memory for tpu_custom_call.1']
    #allocation5 [shape = 'u8[65536]{0}', space=vmem, size = 0x10000, scoped, tag = 'input window, operand 1, single buffered']
    #allocation6 [shape = 's32[1]{0}', space=sflag, size = 0x4, scoped, tag = 'scoped memory for tpu_custom_call.1']
    #allocation7 [shape = 'u8[512]{0}', space=vmem, size = 0x400, scoped, tag = 'input window, operand 2, single buffered']
    #allocation8 [shape = 'u8[6144]{0}', space=vmem, size = 0x1800, scoped, tag = 'input window, operand 3, single buffered']
    #allocation9 [shape = 's32[1]{0}', space=sflag, size = 0x4, scoped, tag = 'scoped memory for tpu_custom_call.1']
    #allocation10 [shape = 'u8[512]{0}', space=vmem, size = 0x400, scoped, tag = 'input window, operand 4, single buffered']
    #allocation11 [shape = 'u8[65536]{0}', space=vmem, size = 0x10000, scoped, tag = 'input window, operand 5, single buffered']
    #allocation12 [shape = 's32[1]{0}', space=sflag, size = 0x4, scoped, tag = 'scoped memory for tpu_custom_call.1']
    #allocation13 [shape = 'u8[512]{0}', space=vmem, size = 0x400, scoped, tag = 'input window, operand 6, single buffered']
    #allocation14 [shape = 'u8[98304]{0}', space=vmem, size = 0x18000, scoped, tag = 'output window, operand 0']
    %12 = vsyncpa [#allocation3], 0
    %s13 = scalar_lea.sflag [#allocation3], 1
    %14 = vsyncpa %s13, 0
    %15 = vsyncpa [#allocation6], 0
    %16 = vsyncpa [#allocation9], 0
    %17 = vsyncpa [#allocation12], 0
    %18 = vsyncpa [#allocation4], 0
    %s19 = scalar_lea.sflag [#allocation4], 1
    %20 = vsyncpa %s19, 0
    loop: start=0, step=1, limit=8
    $region2: #{tpu_custom_call.1} parent=1 // loop_pre_header
      _
    $region3: #{tpu_custom_call.1} parent=1 // loop_header
      %s22 = sphi 0, %s26
      %p23 = scmp.ge.s32.totalorder %s22, 8
      %s29 = sphi 0, %s41
      %s30 = sphi 0, %s37
      %s31 = sphi 0, %s29
      %s32 = sphi 0, %s30
      %s33 = sphi 0, %s31
      %s34 = sphi 0, %s32
      %s44 = sphi 0, %s46
      %s47 = sphi 0, %s44
      %s48 = sphi 0, %s47
      %s64 = sphi 0, %s48
      %s68 = sphi 0, %s68
      %s70 = sphi 0, %s68
      %s71 = sphi 0, %s70
      %s85 = sphi 0, %s71
      %s89 = sphi 0, %s89
      %s91 = sphi 0, %s89
      %s92 = sphi 0, %s91
      %s106 = sphi 0, %s92
      %s110 = sphi 0, %s110
      %s112 = sphi 0, %s110
      %s113 = sphi 0, %s112
      %s127 = sphi 0, %s113
      %s131 = sphi 0, %s131
      %s133 = sphi 0, %s131
      %s134 = sphi 0, %s133
      %s148 = sphi 0, %s134
      %s152 = sphi 0, %s152
      %s154 = sphi 0, %s152
      %s155 = sphi 0, %s154
      %s169 = sphi 0, %s155
      %s173 = sphi 0, %s173
      %s175 = sphi 0, %s173
      %s176 = sphi 0, %s175
      %s190 = sphi 0, %s176
      %s198 = sphi 0, %s200
      %s201 = sphi 0, %s198
      %s202 = sphi 0, %s201
      %s218 = sphi 0, %s202
    $region4: #{tpu_custom_call.1} parent=1 // loop_header_branch
      %25 = sbr.rel (%p23) target = $region8
    $region5: #{tpu_custom_call.1} parent=1 // loop_body
      %s27 = ssub.s32 %s22, 1
      %s28 = ssub.s32 %s22, 2
      %s35 = sadd.s32 1, %s30
      %p36 = scmp.ge.s32.totalorder %s35, 3
      %s37 = scalar_select %p36, 0, %s35
      %s38 = sadd.s32 1, %s29
      %s39 = scalar_select %p36, %s38, %s29
      %p40 = scmp.ge.s32.totalorder %s39, 2
      %s41 = scalar_select %p40, 0, %s39
      %s42 = ssub.s32 %s29, %s41
      %p43 = scmp.eq.s32.totalorder %s42, 0
      %s45 = sadd.s32 %s44, 1
      %s46 = scalar_select %p43, %s44, %s45
      %p49 = pneg %p43
      %p50 = scmp.eq.s32.totalorder %s22, 5
      %p51 = por %p49, %p50
      %p52 = scmp.ne.s32.totalorder %s44, %s47
      %p53 = scmp.eq.s32.totalorder %s22, 0
      %p54 = por %p52, %p53
      %p55 = scmp.ne.s32.totalorder %s44, %s47
      %p56 = scmp.eq.s32.totalorder %s27, 5
      %p57 = por %p55, %p56
      %p58 = scmp.ne.s32.totalorder %s47, %s48
      %p59 = scmp.eq.s32.totalorder %s27, 0
      %p60 = por %p58, %p59
      %p61 = scmp.ne.s32.totalorder %s47, %s48
      %p62 = scmp.eq.s32.totalorder %s28, 5
      %p63 = por %p61, %p62
      %p65 = scmp.ne.s32.totalorder %s48, %s64
      %p66 = scmp.eq.s32.totalorder %s28, 0
      %p67 = por %p65, %p66
      %s69 = sadd.s32 %s68, 1
      %p72 = scmp.eq.s32.totalorder %s22, 5
      %p73 = scmp.ne.s32.totalorder %s68, %s70
      %p74 = scmp.eq.s32.totalorder %s22, 0
      %p75 = por %p73, %p74
      %p76 = scmp.ne.s32.totalorder %s68, %s70
      %p77 = scmp.eq.s32.totalorder %s27, 5
      %p78 = por %p76, %p77
      %p79 = scmp.ne.s32.totalorder %s70, %s71
      %p80 = scmp.eq.s32.totalorder %s27, 0
      %p81 = por %p79, %p80
      %p82 = scmp.ne.s32.totalorder %s70, %s71
      %p83 = scmp.eq.s32.totalorder %s28, 5
      %p84 = por %p82, %p83
      %p86 = scmp.ne.s32.totalorder %s71, %s85
      %p87 = scmp.eq.s32.totalorder %s28, 0
      %p88 = por %p86, %p87
      %s90 = sadd.s32 %s89, 1
      %p93 = scmp.eq.s32.totalorder %s22, 5
      %p94 = scmp.ne.s32.totalorder %s89, %s91
      %p95 = scmp.eq.s32.totalorder %s22, 0
      %p96 = por %p94, %p95
      %p97 = scmp.ne.s32.totalorder %s89, %s91
      %p98 = scmp.eq.s32.totalorder %s27, 5
      %p99 = por %p97, %p98
      %p100 = scmp.ne.s32.totalorder %s91, %s92
      %p101 = scmp.eq.s32.totalorder %s27, 0
      %p102 = por %p100, %p101
      %p103 = scmp.ne.s32.totalorder %s91, %s92
      %p104 = scmp.eq.s32.totalorder %s28, 5
      %p105 = por %p103, %p104
      %p107 = scmp.ne.s32.totalorder %s92, %s106
      %p108 = scmp.eq.s32.totalorder %s28, 0
      %p109 = por %p107, %p108
      %s111 = sadd.s32 %s110, 1
      %p114 = scmp.eq.s32.totalorder %s22, 5
      %p115 = scmp.ne.s32.totalorder %s110, %s112
      %p116 = scmp.eq.s32.totalorder %s22, 0
      %p117 = por %p115, %p116
      %p118 = scmp.ne.s32.totalorder %s110, %s112
      %p119 = scmp.eq.s32.totalorder %s27, 5
      %p120 = por %p118, %p119
      %p121 = scmp.ne.s32.totalorder %s112, %s113
      %p122 = scmp.eq.s32.totalorder %s27, 0
      %p123 = por %p121, %p122
      %p124 = scmp.ne.s32.totalorder %s112, %s113
      %p125 = scmp.eq.s32.totalorder %s28, 5
      %p126 = por %p124, %p125
      %p128 = scmp.ne.s32.totalorder %s113, %s127
      %p129 = scmp.eq.s32.totalorder %s28, 0
      %p130 = por %p128, %p129
      %s132 = sadd.s32 %s131, 1
      %p135 = scmp.eq.s32.totalorder %s22, 5
      %p136 = scmp.ne.s32.totalorder %s131, %s133
      %p137 = scmp.eq.s32.totalorder %s22, 0
      %p138 = por %p136, %p137
      %p139 = scmp.ne.s32.totalorder %s131, %s133
      %p140 = scmp.eq.s32.totalorder %s27, 5
      %p141 = por %p139, %p140
      %p142 = scmp.ne.s32.totalorder %s133, %s134
      %p143 = scmp.eq.s32.totalorder %s27, 0
      %p144 = por %p142, %p143
      %p145 = scmp.ne.s32.totalorder %s133, %s134
      %p146 = scmp.eq.s32.totalorder %s28, 5
      %p147 = por %p145, %p146
      %p149 = scmp.ne.s32.totalorder %s134, %s148
      %p150 = scmp.eq.s32.totalorder %s28, 0
      %p151 = por %p149, %p150
      %s153 = sadd.s32 %s152, 1
      %p156 = scmp.eq.s32.totalorder %s22, 5
      %p157 = scmp.ne.s32.totalorder %s152, %s154
      %p158 = scmp.eq.s32.totalorder %s22, 0
      %p159 = por %p157, %p158
      %p160 = scmp.ne.s32.totalorder %s152, %s154
      %p161 = scmp.eq.s32.totalorder %s27, 5
      %p162 = por %p160, %p161
      %p163 = scmp.ne.s32.totalorder %s154, %s155
      %p164 = scmp.eq.s32.totalorder %s27, 0
      %p165 = por %p163, %p164
      %p166 = scmp.ne.s32.totalorder %s154, %s155
      %p167 = scmp.eq.s32.totalorder %s28, 5
      %p168 = por %p166, %p167
      %p170 = scmp.ne.s32.totalorder %s155, %s169
      %p171 = scmp.eq.s32.totalorder %s28, 0
      %p172 = por %p170, %p171
      %s174 = sadd.s32 %s173, 1
      %p177 = scmp.eq.s32.totalorder %s22, 5
      %p178 = scmp.ne.s32.totalorder %s173, %s175
      %p179 = scmp.eq.s32.totalorder %s22, 0
      %p180 = por %p178, %p179
      %p181 = scmp.ne.s32.totalorder %s173, %s175
      %p182 = scmp.eq.s32.totalorder %s27, 5
      %p183 = por %p181, %p182
      %p184 = scmp.ne.s32.totalorder %s175, %s176
      %p185 = scmp.eq.s32.totalorder %s27, 0
      %p186 = por %p184, %p185
      %p187 = scmp.ne.s32.totalorder %s175, %s176
      %p188 = scmp.eq.s32.totalorder %s28, 5
      %p189 = por %p187, %p188
      %p191 = scmp.ne.s32.totalorder %s176, %s190
      %p192 = scmp.eq.s32.totalorder %s28, 0
      %p193 = por %p191, %p192
      %s194 = ssub.s32 %s29, %s41
      %s195 = ssub.s32 %s30, %s37
      %s196 = sor.u32 %s194, %s195
      %p197 = scmp.eq.s32.totalorder %s196, 0
      %s199 = sadd.s32 %s198, 1
      %s200 = scalar_select %p197, %s198, %s199
      %p203 = pneg %p197
      %p204 = scmp.eq.s32.totalorder %s22, 5
      %p205 = por %p203, %p204
      %p206 = scmp.ne.s32.totalorder %s198, %s201
      %p207 = scmp.eq.s32.totalorder %s22, 0
      %p208 = por %p206, %p207
      %p209 = scmp.ne.s32.totalorder %s198, %s201
      %p210 = scmp.eq.s32.totalorder %s27, 5
      %p211 = por %p209, %p210
      %p212 = scmp.ne.s32.totalorder %s201, %s202
      %p213 = scmp.eq.s32.totalorder %s27, 0
      %p214 = por %p212, %p213
      %p215 = scmp.ne.s32.totalorder %s201, %s202
      %p216 = scmp.eq.s32.totalorder %s28, 5
      %p217 = por %p215, %p216
      %p219 = scmp.ne.s32.totalorder %s202, %s218
      %p220 = scmp.eq.s32.totalorder %s28, 0
      %p221 = por %p219, %p220
      %p222 = scmp.le.s32.totalorder 1, %s22
      %p223 = scmp.lt.s32.totalorder %s22, 7
      %p224 = pnand %p222, %p223
      %p225 = pneg %p224
      // Predicated region
      $region9: #{tpu_custom_call.1} parent=5 // pred_check
        _
      $region10: #{tpu_custom_call.1} parent=5 // pred_check_branch
        %227 = sbr.rel (%p224) target = $region12
      $region11: #{tpu_custom_call.1} parent=5 // pred_region
        %s228 = ssub.s32 %s22, 1
        // Predicated region
        $region13: #{tpu_custom_call.1} parent=11 // pred_check
          %p229 = pneg %p81
        $region14: #{tpu_custom_call.1} parent=11 // pred_check_branch
          %231 = sbr.rel (%p229) target = $region16
        $region15: #{tpu_custom_call.1} parent=11 // pred_region
          %s233 = ssub.s32 2048, 2048
          %234 = vsyncadd [#allocation6], %s233
          %s235 = sshll.u32 [#allocation5], 4
          %s236 = int_to_ptr.vmem [resolvable:$true] %s235
          %241 = dma.hbm_to_vmem [thread:$0]  %s1, 2048, %s236, [#allocation6], 128, 128, 8
        $region16: #{tpu_custom_call.1} parent=11 // pred_fallthru
          _
        // Predicated region
        $region17: #{tpu_custom_call.1} parent=11 // pred_check
          %p242 = pneg %p102
        $region18: #{tpu_custom_call.1} parent=11 // pred_check_branch
          %244 = sbr.rel (%p242) target = $region20
        $region19: #{tpu_custom_call.1} parent=11 // pred_region
          %s246 = ssub.s32 16, 16
          %247 = vsyncadd [#allocation6], %s246
          %s249 = sshll.u32 [#allocation7], 4
          %s250 = int_to_ptr.vmem [resolvable:$true] %s249
          %252 = dma.hbm_to_vmem [thread:$0]  %s2, 16, %s250, [#allocation6]
        $region20: #{tpu_custom_call.1} parent=11 // pred_fallthru
          _
        // Predicated region
        $region21: #{tpu_custom_call.1} parent=11 // pred_check
          %p253 = pneg %p123
        $region22: #{tpu_custom_call.1} parent=11 // pred_check_branch
          %255 = sbr.rel (%p253) target = $region24
        $region23: #{tpu_custom_call.1} parent=11 // pred_region
          %s257 = ssub.s32 192, 192
          %258 = vsyncadd [#allocation9], %s257
          %s259 = sshll.u32 [#allocation8], 4
          %s260 = int_to_ptr.vmem [resolvable:$true] %s259
          %265 = dma.hbm_to_vmem [thread:$0]  %s3, 192, %s260, [#allocation9], 64, 64, 4
        $region24: #{tpu_custom_call.1} parent=11 // pred_fallthru
          _
        // Predicated region
        $region25: #{tpu_custom_call.1} parent=11 // pred_check
          %p266 = pneg %p144
        $region26: #{tpu_custom_call.1} parent=11 // pred_check_branch
          %268 = sbr.rel (%p266) target = $region28
        $region27: #{tpu_custom_call.1} parent=11 // pred_region
          %s270 = ssub.s32 16, 16
          %271 = vsyncadd [#allocation9], %s270
          %s273 = sshll.u32 [#allocation10], 4
          %s274 = int_to_ptr.vmem [resolvable:$true] %s273
          %276 = dma.hbm_to_vmem [thread:$0]  %s4, 16, %s274, [#allocation9]
        $region28: #{tpu_custom_call.1} parent=11 // pred_fallthru
          _
        // Predicated region
        $region29: #{tpu_custom_call.1} parent=11 // pred_check
          %p277 = pneg %p165
        $region30: #{tpu_custom_call.1} parent=11 // pred_check_branch
          %279 = sbr.rel (%p277) target = $region32
        $region31: #{tpu_custom_call.1} parent=11 // pred_region
          %s281 = ssub.s32 2048, 2048
          %282 = vsyncadd [#allocation12], %s281
          %s283 = sshll.u32 [#allocation11], 4
          %s284 = int_to_ptr.vmem [resolvable:$true] %s283
          %289 = dma.hbm_to_vmem [thread:$0]  %s5, 2048, %s284, [#allocation12], 128, 128, 8
        $region32: #{tpu_custom_call.1} parent=11 // pred_fallthru
          _
        // Predicated region
        $region33: #{tpu_custom_call.1} parent=11 // pred_check
          %p290 = pneg %p186
        $region34: #{tpu_custom_call.1} parent=11 // pred_check_branch
          %292 = sbr.rel (%p290) target = $region36
        $region35: #{tpu_custom_call.1} parent=11 // pred_region
          %s294 = ssub.s32 16, 16
          %295 = vsyncadd [#allocation12], %s294
          %s297 = sshll.u32 [#allocation13], 4
          %s298 = int_to_ptr.vmem [resolvable:$true] %s297
          %300 = dma.hbm_to_vmem [thread:$0]  %s6, 16, %s298, [#allocation12]
        $region36: #{tpu_custom_call.1} parent=11 // pred_fallthru
          _
      $region12: #{tpu_custom_call.1} parent=5 // pred_fallthru
        _
      %p301 = scmp.lt.s32.totalorder %s22, 6
      // Predicated region
      $region37: #{tpu_custom_call.1} parent=5 // pred_check
        %p302 = pneg %p301
      $region38: #{tpu_custom_call.1} parent=5 // pred_check_branch
        %304 = sbr.rel (%p302) target = $region40
      $region39: #{tpu_custom_call.1} parent=5 // pred_region
        // Predicated region
        $region41: #{tpu_custom_call.1} parent=39 // pred_check
          %p305 = pneg %p54
        $region42: #{tpu_custom_call.1} parent=39 // pred_check_branch
          %307 = sbr.rel (%p305) target = $region44
        $region43: #{tpu_custom_call.1} parent=39 // pred_region
          %s308 = sand.u32 %s44, 1
          %s309 = scalar_lea.sflag [#allocation3], %s308
          %s310 = sand.u32 %s44, 1
          %s311 = smul.addr %s310, 480
          %s312 = scalar_lea.vmem [#allocation2], %s311
          %s314 = ssub.s32 7680, 7680
          %315 = vsyncadd %s309, %s314
          %s316 = smul.addr %s29, 60
          %s317 = smul.addr %s316, 128
          %s318 = scalar_lea.hbm %s0, %s317
          %s319 = sshll.u32 %s312, 4
          %s320 = int_to_ptr.vmem [resolvable:$true] %s319
          %325 = dma.hbm_to_vmem [thread:$0]  %s318, 7680, %s320, %s309, 128, 128, 8
        $region44: #{tpu_custom_call.1} parent=39 // pred_fallthru
          _
      $region40: #{tpu_custom_call.1} parent=5 // pred_fallthru
        _
      %p326 = scmp.le.s32.totalorder 1, %s22
      %p327 = scmp.lt.s32.totalorder %s22, 7
      %p328 = pnand %p326, %p327
      %p329 = pneg %p328
      // Predicated region
      $region45: #{tpu_custom_call.1} parent=5 // pred_check
        _
      $region46: #{tpu_custom_call.1} parent=5 // pred_check_branch
        %331 = sbr.rel (%p328) target = $region48
      $region47: #{tpu_custom_call.1} parent=5 // pred_region
        %s332 = ssub.s32 %s22, 1
        %s333 = sand.u32 %s47, 1
        %s334 = scalar_lea.sflag [#allocation3], %s333
        %s335 = sand.u32 %s47, 1
        %s336 = smul.addr %s335, 480
        %s337 = scalar_lea.vmem [#allocation2], %s336
        // Predicated region
        $region49: #{tpu_custom_call.1} parent=47 // pred_check
          %p338 = pneg %p60
        $region50: #{tpu_custom_call.1} parent=47 // pred_check_branch
          %340 = sbr.rel (%p338) target = $region52
        $region51: #{tpu_custom_call.1} parent=47 // pred_region
          %341 = dma.done %s334, 7680
        $region52: #{tpu_custom_call.1} parent=47 // pred_fallthru
          _
        // Predicated region
        $region53: #{tpu_custom_call.1} parent=47 // pred_check
          %p342 = pneg %p81
        $region54: #{tpu_custom_call.1} parent=47 // pred_check_branch
          %344 = sbr.rel (%p342) target = $region56
        $region55: #{tpu_custom_call.1} parent=47 // pred_region
          %345 = dma.done [#allocation6], 2048
        $region56: #{tpu_custom_call.1} parent=47 // pred_fallthru
          _
        // Predicated region
        $region57: #{tpu_custom_call.1} parent=47 // pred_check
          %p346 = pneg %p102
        $region58: #{tpu_custom_call.1} parent=47 // pred_check_branch
          %348 = sbr.rel (%p346) target = $region60
        $region59: #{tpu_custom_call.1} parent=47 // pred_region
          %349 = dma.done [#allocation6], 16
        $region60: #{tpu_custom_call.1} parent=47 // pred_fallthru
          _
        // Predicated region
        $region61: #{tpu_custom_call.1} parent=47 // pred_check
          %p350 = pneg %p123
        $region62: #{tpu_custom_call.1} parent=47 // pred_check_branch
          %352 = sbr.rel (%p350) target = $region64
        $region63: #{tpu_custom_call.1} parent=47 // pred_region
          %353 = dma.done [#allocation9], 192
        $region64: #{tpu_custom_call.1} parent=47 // pred_fallthru
          _
        // Predicated region
        $region65: #{tpu_custom_call.1} parent=47 // pred_check
          %p354 = pneg %p144
        $region66: #{tpu_custom_call.1} parent=47 // pred_check_branch
          %356 = sbr.rel (%p354) target = $region68
        $region67: #{tpu_custom_call.1} parent=47 // pred_region
          %357 = dma.done [#allocation9], 16
        $region68: #{tpu_custom_call.1} parent=47 // pred_fallthru
          _
        // Predicated region
        $region69: #{tpu_custom_call.1} parent=47 // pred_check
          %p358 = pneg %p165
        $region70: #{tpu_custom_call.1} parent=47 // pred_check_branch
          %360 = sbr.rel (%p358) target = $region72
        $region71: #{tpu_custom_call.1} parent=47 // pred_region
          %361 = dma.done [#allocation12], 2048
        $region72: #{tpu_custom_call.1} parent=47 // pred_fallthru
          _
        // Predicated region
        $region73: #{tpu_custom_call.1} parent=47 // pred_check
          %p362 = pneg %p186
        $region74: #{tpu_custom_call.1} parent=47 // pred_check_branch
          %364 = sbr.rel (%p362) target = $region76
        $region75: #{tpu_custom_call.1} parent=47 // pred_region
          %365 = dma.done [#allocation12], 16
        $region76: #{tpu_custom_call.1} parent=47 // pred_fallthru
          _
        %s366 = sand.u32 %s47, 1
        %s367 = scalar_lea.sflag [#allocation3], %s366
        %s368 = sand.u32 %s47, 1
        %s369 = smul.addr %s368, 480
        %s370 = scalar_lea.vmem [#allocation2], %s369
        %p371 = pneg %p60
        %p372 = pneg %p57
        %p373 = pneg %p81
        %p374 = pneg %p78
        %p375 = pneg %p102
        %p376 = pneg %p99
        %p377 = pneg %p123
        %p378 = pneg %p120
        %p379 = pneg %p144
        %p380 = pneg %p141
        %p381 = pneg %p165
        %p382 = pneg %p162
        %p383 = pneg %p186
        %p384 = pneg %p183
        %p385 = pneg %p214
        %p386 = pneg %p211
        %s387 = sand.u32 %s201, 1
        %s388 = scalar_lea.sflag [#allocation4], %s387
        %s389 = sand.u32 %s201, 1
        %s390 = smul.addr %s389, 96
        %s391 = scalar_lea.vmem [#allocation14], %s390
        %s392 = smul.u32 6, %s32
        %s393 = smul.u32 %s32, 6
        %s394 = smul.u32 %s393, 24
        %s395 = scalar_lea.vmem %s337, %s394 [#allocation2]
        %v396 = vld [vmem:[%s395] sm:$0xff]
        %v397 = vld [vmem:[%s395 + $0x8] sm:$0xff]
        %v398 = vld [vmem:[%s395 + $0x10] sm:$0xff]
        %v399 = vld [vmem:[%s395 + $0x18] sm:$0xff]
        %v400 = vld [vmem:[%s395 + $0x20] sm:$0xff]
        %v401 = vld [vmem:[%s395 + $0x28] sm:$0xff]
        %v402 = vld [vmem:[%s395 + $0x30] sm:$0xff]
        %v403 = vld [vmem:[%s395 + $0x38] sm:$0xff]
        %v404 = vld [vmem:[%s395 + $0x40] sm:$0xff]
        %v405 = vld [vmem:[%s395 + $0x48] sm:$0xff]
        %v406 = vld [vmem:[%s395 + $0x50] sm:$0xff]
        %v407 = vld [vmem:[%s395 + $0x58] sm:$0xff]
        %v408 = vld [vmem:[%s395 + $0x60] sm:$0xff]
        %v409 = vld [vmem:[%s395 + $0x68] sm:$0xff]
        %v410 = vld [vmem:[%s395 + $0x70] sm:$0xff]
        %v411 = vld [vmem:[%s395 + $0x78] sm:$0xff]
        %v412 = vld [vmem:[%s395 + $0x80] sm:$0xff]
        %v413 = vld [vmem:[%s395 + $0x88] sm:$0xff]
        %v414 = vld [vmem:[%s395 + $0x90] sm:$0xff]
        %v415 = vld [vmem:[%s395 + $0x98] sm:$0xff]
        %v416 = vld [vmem:[%s395 + $0xa0] sm:$0xff]
        %v417 = vld [vmem:[%s395 + $0xa8] sm:$0xff]
        %v418 = vld [vmem:[%s395 + $0xb0] sm:$0xff]
        %v419 = vld [vmem:[%s395 + $0xb8] sm:$0xff]
        %v420 = vld [vmem:[#allocation5] sm:$0xff]
        %v421 = vld [vmem:[#allocation5 + $0x8] sm:$0xff]
        %v422 = vld [vmem:[#allocation5 + $0x10] sm:$0xff]
        %v423 = vld [vmem:[#allocation5 + $0x18] sm:$0xff]
        %v424 = vld [vmem:[#allocation5 + $0x20] sm:$0xff]
        %v425 = vld [vmem:[#allocation5 + $0x28] sm:$0xff]
        %v426 = vld [vmem:[#allocation5 + $0x30] sm:$0xff]
        %v427 = vld [vmem:[#allocation5 + $0x38] sm:$0xff]
        %v428 = vld [vmem:[#allocation5 + $0x40] sm:$0xff]
        %v429 = vld [vmem:[#allocation5 + $0x48] sm:$0xff]
        %v430 = vld [vmem:[#allocation5 + $0x50] sm:$0xff]
        %v431 = vld [vmem:[#allocation5 + $0x58] sm:$0xff]
        %v432 = vld [vmem:[#allocation5 + $0x60] sm:$0xff]
        %v433 = vld [vmem:[#allocation5 + $0x68] sm:$0xff]
        %v434 = vld [vmem:[#allocation5 + $0x70] sm:$0xff]
        %v435 = vld [vmem:[#allocation5 + $0x78] sm:$0xff]
        %v436 = vld [vmem:[#allocation7] sm:$0x1]
        %v438 = vlaneseq
        %v439 = vshrl.u32 %v438, 7
        %v440 = vsub.s32 0, %v439
        %v441 = vrot.slane %v436, %v440
        %443 = vmatprep.subr.mxu0 0.0
        %444 = vmatpush1.msra.mxu0 %v420
        %445 = vmatprep.subr.mxu0 0.0
        %446 = vmatpush1.msra.mxu0 %v421
        %447 = vmatprep.subr.mxu0 0.0
        %448 = vmatpush1.msra.mxu0 %v422
        %449 = vmatprep.subr.mxu0 0.0
        %450 = vmatpush1.msra.mxu0 %v423
        %451 = vmatprep.subr.mxu0 0.0
        %452 = vmatpush1.msra.mxu0 %v424
        %453 = vmatprep.subr.mxu0 0.0
        %454 = vmatpush1.msra.mxu0 %v425
        %455 = vmatprep.subr.mxu0 0.0
        %456 = vmatpush1.msra.mxu0 %v426
        %457 = vmatprep.subr.mxu0 0.0
        %458 = vmatpush1.msra.mxu0 %v427
        %459 = vmatprep.subr.mxu0 0.0
        %460 = vmatpush1.msra.mxu0 %v428
        %461 = vmatprep.subr.mxu0 0.0
        %462 = vmatpush1.msra.mxu0 %v429
        %463 = vmatprep.subr.mxu0 0.0
        %464 = vmatpush1.msra.mxu0 %v430
        %465 = vmatprep.subr.mxu0 0.0
        %466 = vmatpush1.msra.mxu0 %v431
        %467 = vmatprep.subr.mxu0 0.0
        %468 = vmatpush1.msra.mxu0 %v432
        %469 = vmatprep.subr.mxu0 0.0
        %470 = vmatpush1.msra.mxu0 %v433
        %471 = vmatprep.subr.mxu0 0.0
        %472 = vmatpush1.msra.mxu0 %v434
        %473 = vmatprep.subr.mxu0 0.0
        %474 = vmatpush1.msra.mxu0 %v435
        %475 = vmatprep.subr.mxu0 0.0
        %476 = vmatpush1.msra.mxu0 0.0
        %477 = vmatprep.subr.mxu0 0.0
        %478 = vmatpush1.msra.mxu0 0.0
        %479 = vmatprep.subr.mxu0 0.0
        %480 = vmatpush1.msra.mxu0 0.0
        %481 = vmatprep.subr.mxu0 0.0
        %482 = vmatpush1.msra.mxu0 0.0
        %483 = vmatprep.subr.mxu0 0.0
        %484 = vmatpush1.msra.mxu0 0.0
        %485 = vmatprep.subr.mxu0 0.0
        %486 = vmatpush1.msra.mxu0 0.0
        %487 = vmatprep.subr.mxu0 0.0
        %488 = vmatpush1.msra.mxu0 0.0
        %489 = vmatprep.subr.mxu0 0.0
        %490 = vmatpush1.msra.mxu0 0.0
        %491 = vmatprep.subr.mxu0 0.0
        %492 = vmatpush1.msra.mxu0 0.0
        %493 = vmatprep.subr.mxu0 0.0
        %494 = vmatpush1.msra.mxu0 0.0
        %495 = vmatprep.subr.mxu0 0.0
        %496 = vmatpush1.msra.mxu0 0.0
        %497 = vmatprep.subr.mxu0 0.0
        %498 = vmatpush1.msra.mxu0 0.0
        %499 = vmatprep.subr.mxu0 0.0
        %500 = vmatpush1.msra.mxu0 0.0
        %501 = vmatprep.subr.mxu0 0.0
        %502 = vmatpush1.msra.mxu0 0.0
        %503 = vmatprep.subr.mxu0 0.0
        %504 = vmatpush1.msra.mxu0 0.0
        %505 = vmatprep.subr.mxu0 0.0
        %506 = vmatpush1.msra.mxu0 0.0
        %507 = vmatprep.mubr.f32.mxu0 0.0
        %508 = vmatmul.mubr.f32.gmra.mrb[0].mxu0 %v396
        %v509 = vpop.f32.mrb[0].mxu0
        %v510 = vadd.f32 %v441, %v509
        %v511 = vpop.f32.mrb[0].mxu0
        %512 = vmatprep.mubr.f32.mxu0 0.0
        %513 = vmatmul.mubr.f32.gmra.mrb[0].mxu0 %v397
        %v514 = vpop.f32.mrb[0].mxu0
        %v515 = vadd.f32 %v441, %v514
        %v516 = vpop.f32.mrb[0].mxu0
        %517 = vmatprep.mubr.f32.mxu0 0.0
        %518 = vmatmul.mubr.f32.gmra.mrb[0].mxu0 %v398
        %v519 = vpop.f32.mrb[0].mxu0
        %v520 = vadd.f32 %v441, %v519
        %v521 = vpop.f32.mrb[0].mxu0
        %522 = vmatprep.mubr.f32.mxu0 0.0
        %523 = vmatmul.mubr.f32.gmra.mrb[0].mxu0 %v399
        %v524 = vpop.f32.mrb[0].mxu0
        %v525 = vadd.f32 %v441, %v524
        %v526 = vpop.f32.mrb[0].mxu0
        %527 = vmatprep.mubr.f32.mxu0 0.0
        %528 = vmatmul.mubr.f32.gmra.mrb[0].mxu0 %v400
        %v529 = vpop.f32.mrb[0].mxu0
        %v530 = vadd.f32 %v441, %v529
        %v531 = vpop.f32.mrb[0].mxu0
        %532 = vmatprep.mubr.f32.mxu0 0.0
        %533 = vmatmul.mubr.f32.gmra.mrb[0].mxu0 %v401
        %v534 = vpop.f32.mrb[0].mxu0
        %v535 = vadd.f32 %v441, %v534
        %v536 = vpop.f32.mrb[0].mxu0
        %537 = vmatprep.mubr.f32.mxu0 0.0
        %538 = vmatmul.mubr.f32.gmra.mrb[0].mxu0 %v402
        %v539 = vpop.f32.mrb[0].mxu0
        %v540 = vadd.f32 %v441, %v539
        %v541 = vpop.f32.mrb[0].mxu0
        %542 = vmatprep.mubr.f32.mxu0 0.0
        %543 = vmatmul.mubr.f32.gmra.mrb[0].mxu0 %v403
        %v544 = vpop.f32.mrb[0].mxu0
        %v545 = vadd.f32 %v441, %v544
        %v546 = vpop.f32.mrb[0].mxu0
        %547 = vmatprep.mubr.f32.mxu0 0.0
        %548 = vmatmul.mubr.f32.gmra.mrb[0].mxu0 %v404
        %v549 = vpop.f32.mrb[0].mxu0
        %v550 = vadd.f32 %v441, %v549
        %v551 = vpop.f32.mrb[0].mxu0
        %552 = vmatprep.mubr.f32.mxu0 0.0
        %553 = vmatmul.mubr.f32.gmra.mrb[0].mxu0 %v405
        %v554 = vpop.f32.mrb[0].mxu0
        %v555 = vadd.f32 %v441, %v554
        %v556 = vpop.f32.mrb[0].mxu0
        %557 = vmatprep.mubr.f32.mxu0 0.0
        %558 = vmatmul.mubr.f32.gmra.mrb[0].mxu0 %v406
        %v559 = vpop.f32.mrb[0].mxu0
        %v560 = vadd.f32 %v441, %v559
        %v561 = vpop.f32.mrb[0].mxu0
        %562 = vmatprep.mubr.f32.mxu0 0.0
        %563 = vmatmul.mubr.f32.gmra.mrb[0].mxu0 %v407
        %v564 = vpop.f32.mrb[0].mxu0
        %v565 = vadd.f32 %v441, %v564
        %v566 = vpop.f32.mrb[0].mxu0
        %567 = vmatprep.mubr.f32.mxu0 0.0
        %568 = vmatmul.mubr.f32.gmra.mrb[0].mxu0 %v408
        %v569 = vpop.f32.mrb[0].mxu0
        %v570 = vadd.f32 %v441, %v569
        %v571 = vpop.f32.mrb[0].mxu0
        %572 = vmatprep.mubr.f32.mxu0 0.0
        %573 = vmatmul.mubr.f32.gmra.mrb[0].mxu0 %v409
        %v574 = vpop.f32.mrb[0].mxu0
        %v575 = vadd.f32 %v441, %v574
        %v576 = vpop.f32.mrb[0].mxu0
        %577 = vmatprep.mubr.f32.mxu0 0.0
        %578 = vmatmul.mubr.f32.gmra.mrb[0].mxu0 %v410
        %v579 = vpop.f32.mrb[0].mxu0
        %v580 = vadd.f32 %v441, %v579
        %v581 = vpop.f32.mrb[0].mxu0
        %582 = vmatprep.mubr.f32.mxu0 0.0
        %583 = vmatmul.mubr.f32.gmra.mrb[0].mxu0 %v411
        %v584 = vpop.f32.mrb[0].mxu0
        %v585 = vadd.f32 %v441, %v584
        %v586 = vpop.f32.mrb[0].mxu0
        %587 = vmatprep.mubr.f32.mxu0 0.0
        %588 = vmatmul.mubr.f32.gmra.mrb[0].mxu0 %v412
        %v589 = vpop.f32.mrb[0].mxu0
        %v590 = vadd.f32 %v441, %v589
        %v591 = vpop.f32.mrb[0].mxu0
        %592 = vmatprep.mubr.f32.mxu0 0.0
        %593 = vmatmul.mubr.f32.gmra.mrb[0].mxu0 %v413
        %v594 = vpop.f32.mrb[0].mxu0
        %v595 = vadd.f32 %v441, %v594
        %v596 = vpop.f32.mrb[0].mxu0
        %597 = vmatprep.mubr.f32.mxu0 0.0
        %598 = vmatmul.mubr.f32.gmra.mrb[0].mxu0 %v414
        %v599 = vpop.f32.mrb[0].mxu0
        %v600 = vadd.f32 %v441, %v599
        %v601 = vpop.f32.mrb[0].mxu0
        %602 = vmatprep.mubr.f32.mxu0 0.0
        %603 = vmatmul.mubr.f32.gmra.mrb[0].mxu0 %v415
        %v604 = vpop.f32.mrb[0].mxu0
        %v605 = vadd.f32 %v441, %v604
        %v606 = vpop.f32.mrb[0].mxu0
        %607 = vmatprep.mubr.f32.mxu0 0.0
        %608 = vmatmul.mubr.f32.gmra.mrb[0].mxu0 %v416
        %v609 = vpop.f32.mrb[0].mxu0
        %v610 = vadd.f32 %v441, %v609
        %v611 = vpop.f32.mrb[0].mxu0
        %612 = vmatprep.mubr.f32.mxu0 0.0
        %613 = vmatmul.mubr.f32.gmra.mrb[0].mxu0 %v417
        %v614 = vpop.f32.mrb[0].mxu0
        %v615 = vadd.f32 %v441, %v614
        %v616 = vpop.f32.mrb[0].mxu0
        %617 = vmatprep.mubr.f32.mxu0 0.0
        %618 = vmatmul.mubr.f32.gmra.mrb[0].mxu0 %v418
        %v619 = vpop.f32.mrb[0].mxu0
        %v620 = vadd.f32 %v441, %v619
        %v621 = vpop.f32.mrb[0].mxu0
        %622 = vmatprep.mubr.f32.mxu0 0.0
        %623 = vmatmul.mubr.f32.gmra.mrb[0].mxu0 %v419
        %v624 = vpop.f32.mrb[0].mxu0
        %v625 = vadd.f32 %v441, %v624
        %v626 = vpop.f32.mrb[0].mxu0
        %627 = vdwg.mxu0
        %v628 = vmax.f32 %v510, 0.0
        %v629 = vmax.f32 %v515, 0.0
        %v630 = vmax.f32 %v520, 0.0
        %v631 = vmax.f32 %v525, 0.0
        %v632 = vmax.f32 %v530, 0.0
        %v633 = vmax.f32 %v535, 0.0
        %v634 = vmax.f32 %v540, 0.0
        %v635 = vmax.f32 %v545, 0.0
        %v636 = vmax.f32 %v550, 0.0
        %v637 = vmax.f32 %v555, 0.0
        %v638 = vmax.f32 %v560, 0.0
        %v639 = vmax.f32 %v565, 0.0
        %v640 = vmax.f32 %v570, 0.0
        %v641 = vmax.f32 %v575, 0.0
        %v642 = vmax.f32 %v580, 0.0
        %v643 = vmax.f32 %v585, 0.0
        %v644 = vmax.f32 %v590, 0.0
        %v645 = vmax.f32 %v595, 0.0
        %v646 = vmax.f32 %v600, 0.0
        %v647 = vmax.f32 %v605, 0.0
        %v648 = vmax.f32 %v610, 0.0
        %v649 = vmax.f32 %v615, 0.0
        %v650 = vmax.f32 %v620, 0.0
        %v651 = vmax.f32 %v625, 0.0
        %v652 = vmin.f32 %v628, 6.0
        %v653 = vmin.f32 %v629, 6.0
        %v654 = vmin.f32 %v630, 6.0
        %v655 = vmin.f32 %v631, 6.0
        %v656 = vmin.f32 %v632, 6.0
        %v657 = vmin.f32 %v633, 6.0
        %v658 = vmin.f32 %v634, 6.0
        %v659 = vmin.f32 %v635, 6.0
        %v660 = vmin.f32 %v636, 6.0
        %v661 = vmin.f32 %v637, 6.0
        %v662 = vmin.f32 %v638, 6.0
        %v663 = vmin.f32 %v639, 6.0
        %v664 = vmin.f32 %v640, 6.0
        %v665 = vmin.f32 %v641, 6.0
        %v666 = vmin.f32 %v642, 6.0
        %v667 = vmin.f32 %v643, 6.0
        %v668 = vmin.f32 %v644, 6.0
        %v669 = vmin.f32 %v645, 6.0
        %v670 = vmin.f32 %v646, 6.0
        %v671 = vmin.f32 %v647, 6.0
        %v672 = vmin.f32 %v648, 6.0
        %v673 = vmin.f32 %v649, 6.0
        %v674 = vmin.f32 %v650, 6.0
        %v675 = vmin.f32 %v651, 6.0
        %v676 = vld [vmem:[#allocation8] sm:$0x7]
        %v677 = vld [vmem:[#allocation8 + $0x4] sm:$0x7]
        %v678 = vld [vmem:[#allocation8 + $0x8] sm:$0x7]
        %v679 = vlaneseq
        %v680 = vshrl.u32 %v679, 7
        %v681 = vsub.s32 0, %v680
        %v682 = vrot.slane %v676, %v681
        %v683 = vmul.f32 %v652, %v682
        %v684 = vmul.f32 %v653, %v682
        %v685 = vmul.f32 %v655, %v682
        %v686 = vmul.f32 %v656, %v682
        %v687 = vmul.f32 %v658, %v682
        %v688 = vmul.f32 %v659, %v682
        %v689 = vmul.f32 %v661, %v682
        %v690 = vmul.f32 %v662, %v682
        %v691 = vmul.f32 %v664, %v682
        %v692 = vmul.f32 %v665, %v682
        %v693 = vmul.f32 %v667, %v682
        %v694 = vmul.f32 %v668, %v682
        %v695 = vadd.f32 %v683, 0.0
        %v696 = vadd.f32 %v684, 0.0
        %v697 = vadd.f32 %v685, 0.0
        %v698 = vadd.f32 %v686, 0.0
        %v699 = vadd.f32 %v687, 0.0
        %v700 = vadd.f32 %v688, 0.0
        %v701 = vadd.f32 %v689, 0.0
        %v702 = vadd.f32 %v690, 0.0
        %v703 = vadd.f32 %v691, 0.0
        %v704 = vadd.f32 %v692, 0.0
        %v705 = vadd.f32 %v693, 0.0
        %v706 = vadd.f32 %v694, 0.0
        %v707 = vlaneseq
        %v708 = vshrl.u32 %v707, 7
        %v709 = vsub.s32 1, %v708
        %v710 = vrot.slane %v676, %v709
        %v711 = vmul.f32 %v652, %v710
        %v712 = vmul.f32 %v653, %v710
        %v713 = vmul.f32 %v654, %v710
        %v714 = vmul.f32 %v655, %v710
        %v715 = vmul.f32 %v656, %v710
        %v716 = vmul.f32 %v657, %v710
        %v717 = vmul.f32 %v658, %v710
        %v718 = vmul.f32 %v659, %v710
        %v719 = vmul.f32 %v660, %v710
        %v720 = vmul.f32 %v661, %v710
        %v721 = vmul.f32 %v662, %v710
        %v722 = vmul.f32 %v663, %v710
        %v723 = vmul.f32 %v664, %v710
        %v724 = vmul.f32 %v665, %v710
        %v725 = vmul.f32 %v666, %v710
        %v726 = vmul.f32 %v667, %v710
        %v727 = vmul.f32 %v668, %v710
        %v728 = vmul.f32 %v669, %v710
        %vm747 = vcmask 1046528
        %v748 = vrot.slane %v711, 1
        %v749 = vrot.slane %v712, 1
        %v750 = vsel %vm747, %v748, %v749
        %v751 = vrot.slane %v713, 1
        %v752 = vsel %vm747, %v749, %v751
        %v753 = vrot.slane %v714, 1
        %v754 = vrot.slane %v715, 1
        %v755 = vsel %vm747, %v753, %v754
        %v756 = vrot.slane %v716, 1
        %v757 = vsel %vm747, %v754, %v756
        %v758 = vrot.slane %v717, 1
        %v759 = vrot.slane %v718, 1
        %v760 = vsel %vm747, %v758, %v759
        %v761 = vrot.slane %v719, 1
        %v762 = vsel %vm747, %v759, %v761
        %v763 = vrot.slane %v720, 1
        %v764 = vrot.slane %v721, 1
        %v765 = vsel %vm747, %v763, %v764
        %v766 = vrot.slane %v722, 1
        %v767 = vsel %vm747, %v764, %v766
        %v768 = vrot.slane %v723, 1
        %v769 = vrot.slane %v724, 1
        %v770 = vsel %vm747, %v768, %v769
        %v771 = vrot.slane %v725, 1
        %v772 = vsel %vm747, %v769, %v771
        %v773 = vrot.slane %v726, 1
        %v774 = vrot.slane %v727, 1
        %v775 = vsel %vm747, %v773, %v774
        %v776 = vrot.slane %v728, 1
        %v777 = vsel %vm747, %v774, %v776
        %v790 = vadd.f32 %v695, %v750
        %v791 = vadd.f32 %v696, %v752
        %v792 = vadd.f32 %v697, %v755
        %v793 = vadd.f32 %v698, %v757
        %v794 = vadd.f32 %v699, %v760
        %v795 = vadd.f32 %v700, %v762
        %v796 = vadd.f32 %v701, %v765
        %v797 = vadd.f32 %v702, %v767
        %v798 = vadd.f32 %v703, %v770
        %v799 = vadd.f32 %v704, %v772
        %v800 = vadd.f32 %v705, %v775
        %v801 = vadd.f32 %v706, %v777
        %v802 = vlaneseq
        %v803 = vshrl.u32 %v802, 7
        %v804 = vsub.s32 2, %v803
        %v805 = vrot.slane %v676, %v804
        %v806 = vmul.f32 %v652, %v805
        %v807 = vmul.f32 %v653, %v805
        %v808 = vmul.f32 %v654, %v805
        %v809 = vmul.f32 %v655, %v805
        %v810 = vmul.f32 %v656, %v805
        %v811 = vmul.f32 %v657, %v805
        %v812 = vmul.f32 %v658, %v805
        %v813 = vmul.f32 %v659, %v805
        %v814 = vmul.f32 %v660, %v805
        %v815 = vmul.f32 %v661, %v805
        %v816 = vmul.f32 %v662, %v805
        %v817 = vmul.f32 %v663, %v805
        %v818 = vmul.f32 %v664, %v805
        %v819 = vmul.f32 %v665, %v805
        %v820 = vmul.f32 %v666, %v805
        %v821 = vmul.f32 %v667, %v805
        %v822 = vmul.f32 %v668, %v805
        %v823 = vmul.f32 %v669, %v805
        %vm842 = vcmask 1045504
        %v843 = vrot.slane %v806, 2
        %v844 = vrot.slane %v807, 2
        %v845 = vsel %vm842, %v843, %v844
        %v846 = vrot.slane %v808, 2
        %v847 = vsel %vm842, %v844, %v846
        %v848 = vrot.slane %v809, 2
        %v849 = vrot.slane %v810, 2
        %v850 = vsel %vm842, %v848, %v849
        %v851 = vrot.slane %v811, 2
        %v852 = vsel %vm842, %v849, %v851
        %v853 = vrot.slane %v812, 2
        %v854 = vrot.slane %v813, 2
        %v855 = vsel %vm842, %v853, %v854
        %v856 = vrot.slane %v814, 2
        %v857 = vsel %vm842, %v854, %v856
        %v858 = vrot.slane %v815, 2
        %v859 = vrot.slane %v816, 2
        %v860 = vsel %vm842, %v858, %v859
        %v861 = vrot.slane %v817, 2
        %v862 = vsel %vm842, %v859, %v861
        %v863 = vrot.slane %v818, 2
        %v864 = vrot.slane %v819, 2
        %v865 = vsel %vm842, %v863, %v864
        %v866 = vrot.slane %v820, 2
        %v867 = vsel %vm842, %v864, %v866
        %v868 = vrot.slane %v821, 2
        %v869 = vrot.slane %v822, 2
        %v870 = vsel %vm842, %v868, %v869
        %v871 = vrot.slane %v823, 2
        %v872 = vsel %vm842, %v869, %v871
        %v885 = vadd.f32 %v790, %v845
        %v886 = vadd.f32 %v791, %v847
        %v887 = vadd.f32 %v792, %v850
        %v888 = vadd.f32 %v793, %v852
        %v889 = vadd.f32 %v794, %v855
        %v890 = vadd.f32 %v795, %v857
        %v891 = vadd.f32 %v796, %v860
        %v892 = vadd.f32 %v797, %v862
        %v893 = vadd.f32 %v798, %v865
        %v894 = vadd.f32 %v799, %v867
        %v895 = vadd.f32 %v800, %v870
        %v896 = vadd.f32 %v801, %v872
        %v897 = vlaneseq
        %v898 = vshrl.u32 %v897, 7
        %v899 = vsub.s32 0, %v898
        %v900 = vrot.slane %v677, %v899
        %v901 = vmul.f32 %v655, %v900
        %v902 = vmul.f32 %v656, %v900
        %v903 = vmul.f32 %v658, %v900
        %v904 = vmul.f32 %v659, %v900
        %v905 = vmul.f32 %v661, %v900
        %v906 = vmul.f32 %v662, %v900
        %v907 = vmul.f32 %v664, %v900
        %v908 = vmul.f32 %v665, %v900
        %v909 = vmul.f32 %v667, %v900
        %v910 = vmul.f32 %v668, %v900
        %v911 = vmul.f32 %v670, %v900
        %v912 = vmul.f32 %v671, %v900
        %v913 = vadd.f32 %v885, %v901
        %v914 = vadd.f32 %v886, %v902
        %v915 = vadd.f32 %v887, %v903
        %v916 = vadd.f32 %v888, %v904
        %v917 = vadd.f32 %v889, %v905
        %v918 = vadd.f32 %v890, %v906
        %v919 = vadd.f32 %v891, %v907
        %v920 = vadd.f32 %v892, %v908
        %v921 = vadd.f32 %v893, %v909
        %v922 = vadd.f32 %v894, %v910
        %v923 = vadd.f32 %v895, %v911
        %v924 = vadd.f32 %v896, %v912
        %v925 = vlaneseq
        %v926 = vshrl.u32 %v925, 7
        %v927 = vsub.s32 1, %v926
        %v928 = vrot.slane %v677, %v927
        %v929 = vmul.f32 %v655, %v928
        %v930 = vmul.f32 %v656, %v928
        %v931 = vmul.f32 %v657, %v928
        %v932 = vmul.f32 %v658, %v928
        %v933 = vmul.f32 %v659, %v928
        %v934 = vmul.f32 %v660, %v928
        %v935 = vmul.f32 %v661, %v928
        %v936 = vmul.f32 %v662, %v928
        %v937 = vmul.f32 %v663, %v928
        %v938 = vmul.f32 %v664, %v928
        %v939 = vmul.f32 %v665, %v928
        %v940 = vmul.f32 %v666, %v928
        %v941 = vmul.f32 %v667, %v928
        %v942 = vmul.f32 %v668, %v928
        %v943 = vmul.f32 %v669, %v928
        %v944 = vmul.f32 %v670, %v928
        %v945 = vmul.f32 %v671, %v928
        %v946 = vmul.f32 %v672, %v928
        %v965 = vrot.slane %v929, 1
        %v966 = vrot.slane %v930, 1
        %v967 = vsel %vm747, %v965, %v966
        %v968 = vrot.slane %v931, 1
        %v969 = vsel %vm747, %v966, %v968
        %v970 = vrot.slane %v932, 1
        %v971 = vrot.slane %v933, 1
        %v972 = vsel %vm747, %v970, %v971
        %v973 = vrot.slane %v934, 1
        %v974 = vsel %vm747, %v971, %v973
        %v975 = vrot.slane %v935, 1
        %v976 = vrot.slane %v936, 1
        %v977 = vsel %vm747, %v975, %v976
        %v978 = vrot.slane %v937, 1
        %v979 = vsel %vm747, %v976, %v978
        %v980 = vrot.slane %v938, 1
        %v981 = vrot.slane %v939, 1
        %v982 = vsel %vm747, %v980, %v981
        %v983 = vrot.slane %v940, 1
        %v984 = vsel %vm747, %v981, %v983
        %v985 = vrot.slane %v941, 1
        %v986 = vrot.slane %v942, 1
        %v987 = vsel %vm747, %v985, %v986
        %v988 = vrot.slane %v943, 1
        %v989 = vsel %vm747, %v986, %v988
        %v990 = vrot.slane %v944, 1
        %v991 = vrot.slane %v945, 1
        %v992 = vsel %vm747, %v990, %v991
        %v993 = vrot.slane %v946, 1
        %v994 = vsel %vm747, %v991, %v993
        %v1007 = vadd.f32 %v913, %v967
        %v1008 = vadd.f32 %v914, %v969
        %v1009 = vadd.f32 %v915, %v972
        %v1010 = vadd.f32 %v916, %v974
        %v1011 = vadd.f32 %v917, %v977
        %v1012 = vadd.f32 %v918, %v979
        %v1013 = vadd.f32 %v919, %v982
        %v1014 = vadd.f32 %v920, %v984
        %v1015 = vadd.f32 %v921, %v987
        %v1016 = vadd.f32 %v922, %v989
        %v1017 = vadd.f32 %v923, %v992
        %v1018 = vadd.f32 %v924, %v994
        %v1019 = vlaneseq
        %v1020 = vshrl.u32 %v1019, 7
        %v1021 = vsub.s32 2, %v1020
        %v1022 = vrot.slane %v677, %v1021
        %v1023 = vmul.f32 %v655, %v1022
        %v1024 = vmul.f32 %v656, %v1022
        %v1025 = vmul.f32 %v657, %v1022
        %v1026 = vmul.f32 %v658, %v1022
        %v1027 = vmul.f32 %v659, %v1022
        %v1028 = vmul.f32 %v660, %v1022
        %v1029 = vmul.f32 %v661, %v1022
        %v1030 = vmul.f32 %v662, %v1022
        %v1031 = vmul.f32 %v663, %v1022
        %v1032 = vmul.f32 %v664, %v1022
        %v1033 = vmul.f32 %v665, %v1022
        %v1034 = vmul.f32 %v666, %v1022
        %v1035 = vmul.f32 %v667, %v1022
        %v1036 = vmul.f32 %v668, %v1022
        %v1037 = vmul.f32 %v669, %v1022
        %v1038 = vmul.f32 %v670, %v1022
        %v1039 = vmul.f32 %v671, %v1022
        %v1040 = vmul.f32 %v672, %v1022
        %v1059 = vrot.slane %v1023, 2
        %v1060 = vrot.slane %v1024, 2
        %v1061 = vsel %vm842, %v1059, %v1060
        %v1062 = vrot.slane %v1025, 2
        %v1063 = vsel %vm842, %v1060, %v1062
        %v1064 = vrot.slane %v1026, 2
        %v1065 = vrot.slane %v1027, 2
        %v1066 = vsel %vm842, %v1064, %v1065
        %v1067 = vrot.slane %v1028, 2
        %v1068 = vsel %vm842, %v1065, %v1067
        %v1069 = vrot.slane %v1029, 2
        %v1070 = vrot.slane %v1030, 2
        %v1071 = vsel %vm842, %v1069, %v1070
        %v1072 = vrot.slane %v1031, 2
        %v1073 = vsel %vm842, %v1070, %v1072
        %v1074 = vrot.slane %v1032, 2
        %v1075 = vrot.slane %v1033, 2
        %v1076 = vsel %vm842, %v1074, %v1075
        %v1077 = vrot.slane %v1034, 2
        %v1078 = vsel %vm842, %v1075, %v1077
        %v1079 = vrot.slane %v1035, 2
        %v1080 = vrot.slane %v1036, 2
        %v1081 = vsel %vm842, %v1079, %v1080
        %v1082 = vrot.slane %v1037, 2
        %v1083 = vsel %vm842, %v1080, %v1082
        %v1084 = vrot.slane %v1038, 2
        %v1085 = vrot.slane %v1039, 2
        %v1086 = vsel %vm842, %v1084, %v1085
        %v1087 = vrot.slane %v1040, 2
        %v1088 = vsel %vm842, %v1085, %v1087
        %v1101 = vadd.f32 %v1007, %v1061
        %v1102 = vadd.f32 %v1008, %v1063
        %v1103 = vadd.f32 %v1009, %v1066
        %v1104 = vadd.f32 %v1010, %v1068
        %v1105 = vadd.f32 %v1011, %v1071
        %v1106 = vadd.f32 %v1012, %v1073
        %v1107 = vadd.f32 %v1013, %v1076
        %v1108 = vadd.f32 %v1014, %v1078
        %v1109 = vadd.f32 %v1015, %v1081
        %v1110 = vadd.f32 %v1016, %v1083
        %v1111 = vadd.f32 %v1017, %v1086
        %v1112 = vadd.f32 %v1018, %v1088
        %v1113 = vlaneseq
        %v1114 = vshrl.u32 %v1113, 7
        %v1115 = vsub.s32 0, %v1114
        %v1116 = vrot.slane %v678, %v1115
        %v1117 = vmul.f32 %v658, %v1116
        %v1118 = vmul.f32 %v659, %v1116
        %v1119 = vmul.f32 %v661, %v1116
        %v1120 = vmul.f32 %v662, %v1116
        %v1121 = vmul.f32 %v664, %v1116
        %v1122 = vmul.f32 %v665, %v1116
        %v1123 = vmul.f32 %v667, %v1116
        %v1124 = vmul.f32 %v668, %v1116
        %v1125 = vmul.f32 %v670, %v1116
        %v1126 = vmul.f32 %v671, %v1116
        %v1127 = vmul.f32 %v673, %v1116
        %v1128 = vmul.f32 %v674, %v1116
        %v1129 = vadd.f32 %v1101, %v1117
        %v1130 = vadd.f32 %v1102, %v1118
        %v1131 = vadd.f32 %v1103, %v1119
        %v1132 = vadd.f32 %v1104, %v1120
        %v1133 = vadd.f32 %v1105, %v1121
        %v1134 = vadd.f32 %v1106, %v1122
        %v1135 = vadd.f32 %v1107, %v1123
        %v1136 = vadd.f32 %v1108, %v1124
        %v1137 = vadd.f32 %v1109, %v1125
        %v1138 = vadd.f32 %v1110, %v1126
        %v1139 = vadd.f32 %v1111, %v1127
        %v1140 = vadd.f32 %v1112, %v1128
        %v1141 = vlaneseq
        %v1142 = vshrl.u32 %v1141, 7
        %v1143 = vsub.s32 1, %v1142
        %v1144 = vrot.slane %v678, %v1143
        %v1145 = vmul.f32 %v658, %v1144
        %v1146 = vmul.f32 %v659, %v1144
        %v1147 = vmul.f32 %v660, %v1144
        %v1148 = vmul.f32 %v661, %v1144
        %v1149 = vmul.f32 %v662, %v1144
        %v1150 = vmul.f32 %v663, %v1144
        %v1151 = vmul.f32 %v664, %v1144
        %v1152 = vmul.f32 %v665, %v1144
        %v1153 = vmul.f32 %v666, %v1144
        %v1154 = vmul.f32 %v667, %v1144
        %v1155 = vmul.f32 %v668, %v1144
        %v1156 = vmul.f32 %v669, %v1144
        %v1157 = vmul.f32 %v670, %v1144
        %v1158 = vmul.f32 %v671, %v1144
        %v1159 = vmul.f32 %v672, %v1144
        %v1160 = vmul.f32 %v673, %v1144
        %v1161 = vmul.f32 %v674, %v1144
        %v1162 = vmul.f32 %v675, %v1144
        %v1181 = vrot.slane %v1145, 1
        %v1182 = vrot.slane %v1146, 1
        %v1183 = vsel %vm747, %v1181, %v1182
        %v1184 = vrot.slane %v1147, 1
        %v1185 = vsel %vm747, %v1182, %v1184
        %v1186 = vrot.slane %v1148, 1
        %v1187 = vrot.slane %v1149, 1
        %v1188 = vsel %vm747, %v1186, %v1187
        %v1189 = vrot.slane %v1150, 1
        %v1190 = vsel %vm747, %v1187, %v1189
        %v1191 = vrot.slane %v1151, 1
        %v1192 = vrot.slane %v1152, 1
        %v1193 = vsel %vm747, %v1191, %v1192
        %v1194 = vrot.slane %v1153, 1
        %v1195 = vsel %vm747, %v1192, %v1194
        %v1196 = vrot.slane %v1154, 1
        %v1197 = vrot.slane %v1155, 1
        %v1198 = vsel %vm747, %v1196, %v1197
        %v1199 = vrot.slane %v1156, 1
        %v1200 = vsel %vm747, %v1197, %v1199
        %v1201 = vrot.slane %v1157, 1
        %v1202 = vrot.slane %v1158, 1
        %v1203 = vsel %vm747, %v1201, %v1202
        %v1204 = vrot.slane %v1159, 1
        %v1205 = vsel %vm747, %v1202, %v1204
        %v1206 = vrot.slane %v1160, 1
        %v1207 = vrot.slane %v1161, 1
        %v1208 = vsel %vm747, %v1206, %v1207
        %v1209 = vrot.slane %v1162, 1
        %v1210 = vsel %vm747, %v1207, %v1209
        %v1223 = vadd.f32 %v1129, %v1183
        %v1224 = vadd.f32 %v1130, %v1185
        %v1225 = vadd.f32 %v1131, %v1188
        %v1226 = vadd.f32 %v1132, %v1190
        %v1227 = vadd.f32 %v1133, %v1193
        %v1228 = vadd.f32 %v1134, %v1195
        %v1229 = vadd.f32 %v1135, %v1198
        %v1230 = vadd.f32 %v1136, %v1200
        %v1231 = vadd.f32 %v1137, %v1203
        %v1232 = vadd.f32 %v1138, %v1205
        %v1233 = vadd.f32 %v1139, %v1208
        %v1234 = vadd.f32 %v1140, %v1210
        %v1235 = vlaneseq
        %v1236 = vshrl.u32 %v1235, 7
        %v1237 = vsub.s32 2, %v1236
        %v1238 = vrot.slane %v678, %v1237
        %v1239 = vmul.f32 %v658, %v1238
        %v1240 = vmul.f32 %v659, %v1238
        %v1241 = vmul.f32 %v660, %v1238
        %v1242 = vmul.f32 %v661, %v1238
        %v1243 = vmul.f32 %v662, %v1238
        %v1244 = vmul.f32 %v663, %v1238
        %v1245 = vmul.f32 %v664, %v1238
        %v1246 = vmul.f32 %v665, %v1238
        %v1247 = vmul.f32 %v666, %v1238
        %v1248 = vmul.f32 %v667, %v1238
        %v1249 = vmul.f32 %v668, %v1238
        %v1250 = vmul.f32 %v669, %v1238
        %v1251 = vmul.f32 %v670, %v1238
        %v1252 = vmul.f32 %v671, %v1238
        %v1253 = vmul.f32 %v672, %v1238
        %v1254 = vmul.f32 %v673, %v1238
        %v1255 = vmul.f32 %v674, %v1238
        %v1256 = vmul.f32 %v675, %v1238
        %v1275 = vrot.slane %v1239, 2
        %v1276 = vrot.slane %v1240, 2
        %v1277 = vsel %vm842, %v1275, %v1276
        %v1278 = vrot.slane %v1241, 2
        %v1279 = vsel %vm842, %v1276, %v1278
        %v1280 = vrot.slane %v1242, 2
        %v1281 = vrot.slane %v1243, 2
        %v1282 = vsel %vm842, %v1280, %v1281
        %v1283 = vrot.slane %v1244, 2
        %v1284 = vsel %vm842, %v1281, %v1283
        %v1285 = vrot.slane %v1245, 2
        %v1286 = vrot.slane %v1246, 2
        %v1287 = vsel %vm842, %v1285, %v1286
        %v1288 = vrot.slane %v1247, 2
        %v1289 = vsel %vm842, %v1286, %v1288
        %v1290 = vrot.slane %v1248, 2
        %v1291 = vrot.slane %v1249, 2
        %v1292 = vsel %vm842, %v1290, %v1291
        %v1293 = vrot.slane %v1250, 2
        %v1294 = vsel %vm842, %v1291, %v1293
        %v1295 = vrot.slane %v1251, 2
        %v1296 = vrot.slane %v1252, 2
        %v1297 = vsel %vm842, %v1295, %v1296
        %v1298 = vrot.slane %v1253, 2
        %v1299 = vsel %vm842, %v1296, %v1298
        %v1300 = vrot.slane %v1254, 2
        %v1301 = vrot.slane %v1255, 2
        %v1302 = vsel %vm842, %v1300, %v1301
        %v1303 = vrot.slane %v1256, 2
        %v1304 = vsel %vm842, %v1301, %v1303
        %v1317 = vadd.f32 %v1223, %v1277
        %v1318 = vadd.f32 %v1224, %v1279
        %v1319 = vadd.f32 %v1225, %v1282
        %v1320 = vadd.f32 %v1226, %v1284
        %v1321 = vadd.f32 %v1227, %v1287
        %v1322 = vadd.f32 %v1228, %v1289
        %v1323 = vadd.f32 %v1229, %v1292
        %v1324 = vadd.f32 %v1230, %v1294
        %v1325 = vadd.f32 %v1231, %v1297
        %v1326 = vadd.f32 %v1232, %v1299
        %v1327 = vadd.f32 %v1233, %v1302
        %v1328 = vadd.f32 %v1234, %v1304
        %v1329 = vld [vmem:[#allocation10] sm:$0x1]
        %v1331 = vlaneseq
        %v1332 = vshrl.u32 %v1331, 7
        %v1333 = vsub.s32 0, %v1332
        %v1334 = vrot.slane %v1329, %v1333
        %v1336 = vadd.f32 %v1317, %v1334
        %v1337 = vadd.f32 %v1318, %v1334
        %v1338 = vadd.f32 %v1319, %v1334
        %v1339 = vadd.f32 %v1320, %v1334
        %v1340 = vadd.f32 %v1321, %v1334
        %v1341 = vadd.f32 %v1322, %v1334
        %v1342 = vadd.f32 %v1323, %v1334
        %v1343 = vadd.f32 %v1324, %v1334
        %v1344 = vadd.f32 %v1325, %v1334
        %v1345 = vadd.f32 %v1326, %v1334
        %v1346 = vadd.f32 %v1327, %v1334
        %v1347 = vadd.f32 %v1328, %v1334
        %v1348 = vmax.f32 %v1336, 0.0
        %v1349 = vmax.f32 %v1337, 0.0
        %v1350 = vmax.f32 %v1338, 0.0
        %v1351 = vmax.f32 %v1339, 0.0
        %v1352 = vmax.f32 %v1340, 0.0
        %v1353 = vmax.f32 %v1341, 0.0
        %v1354 = vmax.f32 %v1342, 0.0
        %v1355 = vmax.f32 %v1343, 0.0
        %v1356 = vmax.f32 %v1344, 0.0
        %v1357 = vmax.f32 %v1345, 0.0
        %v1358 = vmax.f32 %v1346, 0.0
        %v1359 = vmax.f32 %v1347, 0.0
        %v1360 = vmin.f32 %v1348, 6.0
        %v1361 = vmin.f32 %v1349, 6.0
        %v1362 = vmin.f32 %v1350, 6.0
        %v1363 = vmin.f32 %v1351, 6.0
        %v1364 = vmin.f32 %v1352, 6.0
        %v1365 = vmin.f32 %v1353, 6.0
        %v1366 = vmin.f32 %v1354, 6.0
        %v1367 = vmin.f32 %v1355, 6.0
        %v1368 = vmin.f32 %v1356, 6.0
        %v1369 = vmin.f32 %v1357, 6.0
        %v1370 = vmin.f32 %v1358, 6.0
        %v1371 = vmin.f32 %v1359, 6.0
        %v1372 = vld [vmem:[#allocation11] sm:$0xff]
        %v1373 = vld [vmem:[#allocation11 + $0x8] sm:$0xff]
        %v1374 = vld [vmem:[#allocation11 + $0x10] sm:$0xff]
        %v1375 = vld [vmem:[#allocation11 + $0x18] sm:$0xff]
        %v1376 = vld [vmem:[#allocation11 + $0x20] sm:$0xff]
        %v1377 = vld [vmem:[#allocation11 + $0x28] sm:$0xff]
        %v1378 = vld [vmem:[#allocation11 + $0x30] sm:$0xff]
        %v1379 = vld [vmem:[#allocation11 + $0x38] sm:$0xff]
        %v1380 = vld [vmem:[#allocation11 + $0x40] sm:$0xff]
        %v1381 = vld [vmem:[#allocation11 + $0x48] sm:$0xff]
        %v1382 = vld [vmem:[#allocation11 + $0x50] sm:$0xff]
        %v1383 = vld [vmem:[#allocation11 + $0x58] sm:$0xff]
        %v1384 = vld [vmem:[#allocation11 + $0x60] sm:$0xff]
        %v1385 = vld [vmem:[#allocation11 + $0x68] sm:$0xff]
        %v1386 = vld [vmem:[#allocation11 + $0x70] sm:$0xff]
        %v1387 = vld [vmem:[#allocation11 + $0x78] sm:$0xff]
        %v1388 = vld [vmem:[#allocation13] sm:$0x1]
        %v1390 = vlaneseq
        %v1391 = vshrl.u32 %v1390, 7
        %v1392 = vsub.s32 0, %v1391
        %v1393 = vrot.slane %v1388, %v1392
        %1395 = vmatprep.subr.mxu0 0.0
        %1396 = vmatpush1.msra.mxu0 %v1372
        %1397 = vmatprep.subr.mxu0 0.0
        %1398 = vmatpush1.msra.mxu0 %v1373
        %1399 = vmatprep.subr.mxu0 0.0
        %1400 = vmatpush1.msra.mxu0 %v1374
        %1401 = vmatprep.subr.mxu0 0.0
        %1402 = vmatpush1.msra.mxu0 %v1375
        %1403 = vmatprep.subr.mxu0 0.0
        %1404 = vmatpush1.msra.mxu0 %v1376
        %1405 = vmatprep.subr.mxu0 0.0
        %1406 = vmatpush1.msra.mxu0 %v1377
        %1407 = vmatprep.subr.mxu0 0.0
        %1408 = vmatpush1.msra.mxu0 %v1378
        %1409 = vmatprep.subr.mxu0 0.0
        %1410 = vmatpush1.msra.mxu0 %v1379
        %1411 = vmatprep.subr.mxu0 0.0
        %1412 = vmatpush1.msra.mxu0 %v1380
        %1413 = vmatprep.subr.mxu0 0.0
        %1414 = vmatpush1.msra.mxu0 %v1381
        %1415 = vmatprep.subr.mxu0 0.0
        %1416 = vmatpush1.msra.mxu0 %v1382
        %1417 = vmatprep.subr.mxu0 0.0
        %1418 = vmatpush1.msra.mxu0 %v1383
        %1419 = vmatprep.subr.mxu0 0.0
        %1420 = vmatpush1.msra.mxu0 %v1384
        %1421 = vmatprep.subr.mxu0 0.0
        %1422 = vmatpush1.msra.mxu0 %v1385
        %1423 = vmatprep.subr.mxu0 0.0
        %1424 = vmatpush1.msra.mxu0 %v1386
        %1425 = vmatprep.subr.mxu0 0.0
        %1426 = vmatpush1.msra.mxu0 %v1387
        %1427 = vmatprep.subr.mxu0 0.0
        %1428 = vmatpush1.msra.mxu0 0.0
        %1429 = vmatprep.subr.mxu0 0.0
        %1430 = vmatpush1.msra.mxu0 0.0
        %1431 = vmatprep.subr.mxu0 0.0
        %1432 = vmatpush1.msra.mxu0 0.0
        %1433 = vmatprep.subr.mxu0 0.0
        %1434 = vmatpush1.msra.mxu0 0.0
        %1435 = vmatprep.subr.mxu0 0.0
        %1436 = vmatpush1.msra.mxu0 0.0
        %1437 = vmatprep.subr.mxu0 0.0
        %1438 = vmatpush1.msra.mxu0 0.0
        %1439 = vmatprep.subr.mxu0 0.0
        %1440 = vmatpush1.msra.mxu0 0.0
        %1441 = vmatprep.subr.mxu0 0.0
        %1442 = vmatpush1.msra.mxu0 0.0
        %1443 = vmatprep.subr.mxu0 0.0
        %1444 = vmatpush1.msra.mxu0 0.0
        %1445 = vmatprep.subr.mxu0 0.0
        %1446 = vmatpush1.msra.mxu0 0.0
        %1447 = vmatprep.subr.mxu0 0.0
        %1448 = vmatpush1.msra.mxu0 0.0
        %1449 = vmatprep.subr.mxu0 0.0
        %1450 = vmatpush1.msra.mxu0 0.0
        %1451 = vmatprep.subr.mxu0 0.0
        %1452 = vmatpush1.msra.mxu0 0.0
        %1453 = vmatprep.subr.mxu0 0.0
        %1454 = vmatpush1.msra.mxu0 0.0
        %1455 = vmatprep.subr.mxu0 0.0
        %1456 = vmatpush1.msra.mxu0 0.0
        %1457 = vmatprep.subr.mxu0 0.0
        %1458 = vmatpush1.msra.mxu0 0.0
        %1459 = vmatprep.mubr.f32.mxu0 0.0
        %1460 = vmatmul.mubr.f32.gmra.mrb[0].mxu0 %v1360
        %v1461 = vpop.f32.mrb[0].mxu0
        %v1462 = vadd.f32 %v1393, %v1461
        %v1463 = vpop.f32.mrb[0].mxu0
        %1464 = vmatprep.mubr.f32.mxu0 0.0
        %1465 = vmatmul.mubr.f32.gmra.mrb[0].mxu0 %v1361
        %v1466 = vpop.f32.mrb[0].mxu0
        %v1467 = vadd.f32 %v1393, %v1466
        %v1468 = vpop.f32.mrb[0].mxu0
        %1469 = vmatprep.mubr.f32.mxu0 0.0
        %1470 = vmatmul.mubr.f32.gmra.mrb[0].mxu0 %v1362
        %v1471 = vpop.f32.mrb[0].mxu0
        %v1472 = vadd.f32 %v1393, %v1471
        %v1473 = vpop.f32.mrb[0].mxu0
        %1474 = vmatprep.mubr.f32.mxu0 0.0
        %1475 = vmatmul.mubr.f32.gmra.mrb[0].mxu0 %v1363
        %v1476 = vpop.f32.mrb[0].mxu0
        %v1477 = vadd.f32 %v1393, %v1476
        %v1478 = vpop.f32.mrb[0].mxu0
        %1479 = vmatprep.mubr.f32.mxu0 0.0
        %1480 = vmatmul.mubr.f32.gmra.mrb[0].mxu0 %v1364
        %v1481 = vpop.f32.mrb[0].mxu0
        %v1482 = vadd.f32 %v1393, %v1481
        %v1483 = vpop.f32.mrb[0].mxu0
        %1484 = vmatprep.mubr.f32.mxu0 0.0
        %1485 = vmatmul.mubr.f32.gmra.mrb[0].mxu0 %v1365
        %v1486 = vpop.f32.mrb[0].mxu0
        %v1487 = vadd.f32 %v1393, %v1486
        %v1488 = vpop.f32.mrb[0].mxu0
        %1489 = vmatprep.mubr.f32.mxu0 0.0
        %1490 = vmatmul.mubr.f32.gmra.mrb[0].mxu0 %v1366
        %v1491 = vpop.f32.mrb[0].mxu0
        %v1492 = vadd.f32 %v1393, %v1491
        %v1493 = vpop.f32.mrb[0].mxu0
        %1494 = vmatprep.mubr.f32.mxu0 0.0
        %1495 = vmatmul.mubr.f32.gmra.mrb[0].mxu0 %v1367
        %v1496 = vpop.f32.mrb[0].mxu0
        %v1497 = vadd.f32 %v1393, %v1496
        %v1498 = vpop.f32.mrb[0].mxu0
        %1499 = vmatprep.mubr.f32.mxu0 0.0
        %1500 = vmatmul.mubr.f32.gmra.mrb[0].mxu0 %v1368
        %v1501 = vpop.f32.mrb[0].mxu0
        %v1502 = vadd.f32 %v1393, %v1501
        %v1503 = vpop.f32.mrb[0].mxu0
        %1504 = vmatprep.mubr.f32.mxu0 0.0
        %1505 = vmatmul.mubr.f32.gmra.mrb[0].mxu0 %v1369
        %v1506 = vpop.f32.mrb[0].mxu0
        %v1507 = vadd.f32 %v1393, %v1506
        %v1508 = vpop.f32.mrb[0].mxu0
        %1509 = vmatprep.mubr.f32.mxu0 0.0
        %1510 = vmatmul.mubr.f32.gmra.mrb[0].mxu0 %v1370
        %v1511 = vpop.f32.mrb[0].mxu0
        %v1512 = vadd.f32 %v1393, %v1511
        %v1513 = vpop.f32.mrb[0].mxu0
        %1514 = vmatprep.mubr.f32.mxu0 0.0
        %1515 = vmatmul.mubr.f32.gmra.mrb[0].mxu0 %v1371
        %v1516 = vpop.f32.mrb[0].mxu0
        %v1517 = vadd.f32 %v1393, %v1516
        %v1518 = vpop.f32.mrb[0].mxu0
        %1519 = vdwg.mxu0
        %v1538 = vrot.slane %v399, 1
        %v1539 = vrot.slane %v400, 1
        %v1540 = vsel %vm747, %v1538, %v1539
        %v1541 = vrot.slane %v401, 1
        %v1542 = vsel %vm747, %v1539, %v1541
        %v1543 = vrot.slane %v402, 1
        %v1544 = vrot.slane %v403, 1
        %v1545 = vsel %vm747, %v1543, %v1544
        %v1546 = vrot.slane %v404, 1
        %v1547 = vsel %vm747, %v1544, %v1546
        %v1548 = vrot.slane %v405, 1
        %v1549 = vrot.slane %v406, 1
        %v1550 = vsel %vm747, %v1548, %v1549
        %v1551 = vrot.slane %v407, 1
        %v1552 = vsel %vm747, %v1549, %v1551
        %v1553 = vrot.slane %v408, 1
        %v1554 = vrot.slane %v409, 1
        %v1555 = vsel %vm747, %v1553, %v1554
        %v1556 = vrot.slane %v410, 1
        %v1557 = vsel %vm747, %v1554, %v1556
        %v1558 = vrot.slane %v411, 1
        %v1559 = vrot.slane %v412, 1
        %v1560 = vsel %vm747, %v1558, %v1559
        %v1561 = vrot.slane %v413, 1
        %v1562 = vsel %vm747, %v1559, %v1561
        %v1563 = vrot.slane %v414, 1
        %v1564 = vrot.slane %v415, 1
        %v1565 = vsel %vm747, %v1563, %v1564
        %v1566 = vrot.slane %v416, 1
        %v1567 = vsel %vm747, %v1564, %v1566
        %v1580 = vadd.f32 %v1462, %v1540
        %v1581 = vadd.f32 %v1467, %v1542
        %v1582 = vadd.f32 %v1472, %v1545
        %v1583 = vadd.f32 %v1477, %v1547
        %v1584 = vadd.f32 %v1482, %v1550
        %v1585 = vadd.f32 %v1487, %v1552
        %v1586 = vadd.f32 %v1492, %v1555
        %v1587 = vadd.f32 %v1497, %v1557
        %v1588 = vadd.f32 %v1502, %v1560
        %v1589 = vadd.f32 %v1507, %v1562
        %v1590 = vadd.f32 %v1512, %v1565
        %v1591 = vadd.f32 %v1517, %v1567
        %1592 = vst [vmem:[%s391] sm:$0xff] %v1580
        %1593 = vst [vmem:[%s391 + $0x8] sm:$0xff] %v1581
        %1594 = vst [vmem:[%s391 + $0x10] sm:$0xff] %v1582
        %1595 = vst [vmem:[%s391 + $0x18] sm:$0xff] %v1583
        %1596 = vst [vmem:[%s391 + $0x20] sm:$0xff] %v1584
        %1597 = vst [vmem:[%s391 + $0x28] sm:$0xff] %v1585
        %1598 = vst [vmem:[%s391 + $0x30] sm:$0xff] %v1586
        %1599 = vst [vmem:[%s391 + $0x38] sm:$0xff] %v1587
        %1600 = vst [vmem:[%s391 + $0x40] sm:$0xff] %v1588
        %1601 = vst [vmem:[%s391 + $0x48] sm:$0xff] %v1589
        %1602 = vst [vmem:[%s391 + $0x50] sm:$0xff] %v1590
        %1603 = vst [vmem:[%s391 + $0x58] sm:$0xff] %v1591
        %s1604 = sand.u32 %s201, 1
        %s1605 = scalar_lea.sflag [#allocation4], %s1604
        %s1606 = sand.u32 %s201, 1
        %s1607 = smul.addr %s1606, 96
        %s1608 = scalar_lea.vmem [#allocation14], %s1607
        // Predicated region
        $region77: #{tpu_custom_call.1} parent=47 // pred_check
          %p1609 = pneg %p211
        $region78: #{tpu_custom_call.1} parent=47 // pred_check_branch
          %1611 = sbr.rel (%p1609) target = $region80
        $region79: #{tpu_custom_call.1} parent=47 // pred_region
          %s1612 = smul.u32 6, %s32
          %s1614 = ssub.s32 1536, 1536
          %1615 = vsyncadd %s1605, %s1614
          %s1616 = smul.addr %s1612, 2
          %s1617 = smul.addr %s31, 36
          %s1618 = sadd.s32 %s1616, %s1617
          %s1619 = smul.addr %s1618, 128
          %s1620 = scalar_lea.hbm %s7, %s1619
          %s1621 = sshll.u32 %s1608, 4
          %s1622 = int_to_ptr.vmem [resolvable:$true] %s1621
          %1627 = dma.vmem_to_hbm [thread:$0]  %s1622, 1536, %s1620, %s1605, 128, 128, 8
        $region80: #{tpu_custom_call.1} parent=47 // pred_fallthru
          _
      $region48: #{tpu_custom_call.1} parent=5 // pred_fallthru
        _
      %p1628 = scmp.le.s32.totalorder 2, %s22
      // Predicated region
      $region81: #{tpu_custom_call.1} parent=5 // pred_check
        %p1629 = pneg %p1628
      $region82: #{tpu_custom_call.1} parent=5 // pred_check_branch
        %1631 = sbr.rel (%p1629) target = $region84
      $region83: #{tpu_custom_call.1} parent=5 // pred_region
        %s1632 = ssub.s32 %s22, 2
        // Predicated region
        $region85: #{tpu_custom_call.1} parent=83 // pred_check
          %p1633 = pneg %p217
        $region86: #{tpu_custom_call.1} parent=83 // pred_check_branch
          %1635 = sbr.rel (%p1633) target = $region88
        $region87: #{tpu_custom_call.1} parent=83 // pred_region
          %s1636 = sand.u32 %s202, 1
          %s1637 = scalar_lea.sflag [#allocation4], %s1636
          %s1638 = sand.u32 %s202, 1
          %s1639 = smul.addr %s1638, 96
          %s1640 = scalar_lea.vmem [#allocation14], %s1639
          %1641 = dma.done %s1637, 1536
        $region88: #{tpu_custom_call.1} parent=83 // pred_fallthru
          _
      $region84: #{tpu_custom_call.1} parent=5 // pred_fallthru
        _
    $region6: #{tpu_custom_call.1} parent=1 // loop_footer
      %s26 = sadd.s32 1, %s22
    $region7: #{tpu_custom_call.1} parent=1 // loop_footer_branch
      %21 = sbr.rel target = $region3
    $region8: #{tpu_custom_call.1} parent=1 // loop_exit
      _
    %1642 = vsyncpa [#allocation3], 1
    %s1643 = scalar_lea.sflag [#allocation3], 1
    %1644 = vsyncpa %s1643, 1
    %1645 = vsyncpa [#allocation6], 1
    %1646 = vsyncpa [#allocation9], 1
    %1647 = vsyncpa [#allocation12], 1
    %1648 = vsyncpa [#allocation4], 1
    %s1649 = scalar_lea.sflag [#allocation4], 1
    %1650 = vsyncpa %s1649, 1

</llo_original>
